<compile_context>
chip_gen: v6e
topology: v6e:2x2x1
jax: 0.10.0
libtpu: 0.0.40
codegen_flags: <defaults>
</compile_context>

<pallas_src>
import functools

import jax
import jax.numpy as jnp
from jax import lax
from jax.experimental import pallas as pl
from jax.experimental.pallas import tpu as pltpu
import numpy as np

EXPAND_RATIO = 4
KS = 3  # kernel_size


def _repconv_kernel(x_ref, w_ref, b_ref, o_ref, xpad_ref, patch_ref, *, shortcut):
    # x_ref    : (1, C, H, W)        one batch element, NCHW, f32
    # w_ref    : (O, 9*C)            folded 3x3 weight as im2col matrix, bf16
    # b_ref    : (O, 1)              folded bias, f32
    # o_ref    : (1, O, H*W)         output slab (lane-dense: H*W on lanes)
    # xpad_ref : (C, H+2, W+2)       VMEM scratch: zero-haloed input
    # patch_ref: (9*C, H*W)          VMEM scratch: im2col patch matrix
    C, H, W = x_ref.shape[1], x_ref.shape[2], x_ref.shape[3]

    # Build the zero halo in VMEM (no wrapper-side jnp.pad / HBM round trip).
    # Re-zero every step: cheap (few KiB) and safe under megacore scheduling.
    xpad_ref[...] = jnp.zeros_like(xpad_ref)
    xpad_ref[:, 1:H + 1, 1:W + 1] = x_ref[0]
    xp = xpad_ref[...]                                    # (C, H+2, W+2) f32

    # im2col: 9 shifted views -> one (9C, H*W) patch matrix (static unroll).
    center = None
    for kh in range(KS):
        for kw in range(KS):
            tap = kh * KS + kw
            patch = xp[:, kh:kh + H, kw:kw + W].reshape(C, H * W)
            patch_ref[tap * C:(tap + 1) * C, :] = patch
            if kh == KS // 2 and kw == KS // 2:
                center = patch                            # = un-padded x, f32

    # Single MXU matmul: (O, 9C) @ (9C, H*W) -> (O, H*W), bf16 in / f32 acc.
    acc = jnp.dot(w_ref[...], patch_ref[...].astype(jnp.bfloat16),
                  preferred_element_type=jnp.float32)
    acc = acc + b_ref[...]                                # bias, broadcast over lanes

    if shortcut:
        acc = acc + center                                # residual add in f32

    o_ref[0] = acc.astype(o_ref.dtype)


def repconv_forward_pallas(x_nchw, params):
    """x_nchw: (N, C, H, W) float32. Returns (N, O, H, W), matching PyTorch."""
    N, C, H, W = x_nchw.shape
    w_mat = params["w_mat"]                               # (O, 9C) bf16
    O = w_mat.shape[0]
    b_col = params["b_col"]                               # (O, 1) f32
    shortcut = bool(params["shortcut"])
    if shortcut:
        assert C == O, "shortcut branch requires channels == out_channels"

    kernel = functools.partial(_repconv_kernel, shortcut=shortcut)

    out_flat = pl.pallas_call(
        kernel,
        out_shape=jax.ShapeDtypeStruct((N, O, H * W), x_nchw.dtype),
        grid_spec=pltpu.PrefetchScalarGridSpec(
            num_scalar_prefetch=0,
            grid=(N,),
            in_specs=[
                pl.BlockSpec((1, C, H, W), lambda n: (n, 0, 0, 0)),
                pl.BlockSpec((O, KS * KS * C), lambda n: (0, 0)),
                pl.BlockSpec((O, 1), lambda n: (0, 0)),
            ],
            out_specs=pl.BlockSpec((1, O, H * W), lambda n: (n, 0, 0)),
            scratch_shapes=[
                pltpu.VMEM((C, H + 2, W + 2), jnp.float32),
                pltpu.VMEM((KS * KS * C, H * W), jnp.float32),
            ],
        ),
        compiler_params=pltpu.CompilerParams(
            dimension_semantics=("parallel",),
            vmem_limit_bytes=32 * 1024 * 1024,
        ),
    )(x_nchw, w_mat, b_col)

    # Free trailing-dim split back to NCHW image shape.
    return out_flat.reshape(N, O, H, W)


def init_params(key, channels, out_channels):
    """Deterministic synthetic parameters (PyTorch OIHW conv shapes)."""
    C, O = channels, out_channels
    E = EXPAND_RATIO * O
    ks = jax.random.split(key, 12)
    s = 0.1
    raw = dict(
        w_3x3=s * jax.random.normal(ks[0], (O, C, 3, 3), jnp.float32),
        b_3x3=s * jax.random.normal(ks[1], (O,), jnp.float32),
        w_1x3=s * jax.random.normal(ks[2], (O, C, 1, 3), jnp.float32),
        b_1x3=s * jax.random.normal(ks[3], (O,), jnp.float32),
        w_3x1=s * jax.random.normal(ks[4], (O, C, 3, 1), jnp.float32),
        b_3x1=s * jax.random.normal(ks[5], (O,), jnp.float32),
        w_1x1=s * jax.random.normal(ks[6], (O, C, 1, 1), jnp.float32),
        b_1x1=s * jax.random.normal(ks[7], (O,), jnp.float32),
        w_exp=s * jax.random.normal(ks[8], (E, O, 1, 1), jnp.float32),
        b_exp=s * jax.random.normal(ks[9], (E,), jnp.float32),
        w_shr=s * jax.random.normal(ks[10], (O, E, 1, 1), jnp.float32),
        b_shr=s * jax.random.normal(ks[11], (O,), jnp.float32),
    )
    return raw


def fold_params(raw, channels, out_channels):
    """Exact (f32) fold of the whole linear chain into one 3x3 conv.

    Valid because there is no activation/BN between the branch sum, the 1x1
    expand and the 1x1 shrink in the training-mode forward.
    """
    C, O = channels, out_channels

    # 1) merge the four branches into one 3x3 kernel (zero-pad, sum biases)
    w_merged = (raw["w_3x3"]
                + jnp.pad(raw["w_1x3"], ((0, 0), (0, 0), (1, 1), (0, 0)))
                + jnp.pad(raw["w_3x1"], ((0, 0), (0, 0), (0, 0), (1, 1)))
                + jnp.pad(raw["w_1x1"], ((0, 0), (0, 0), (1, 1), (1, 1))))
    b_merged = raw["b_3x3"] + raw["b_1x3"] + raw["b_3x1"] + raw["b_1x1"]

    # 2) fold the 1x1 expand + 1x1 shrink:  z = Ws(We u + be) + bs
    We = raw["w_exp"][:, :, 0, 0]                      # (E, O)
    Ws = raw["w_shr"][:, :, 0, 0]                      # (O, E)
    W_es = Ws @ We                                     # (O, O)
    w_final = jnp.einsum("om,mcij->ocij", W_es, w_merged)   # OIHW (O, C, 3, 3)
    b_final = W_es @ b_merged + Ws @ raw["b_exp"] + raw["b_shr"]

    # 3) im2col weight matrix; column order = (kh, kw, c), matching the kernel.
    w_mat = jnp.transpose(w_final, (0, 2, 3, 1)).reshape(O, KS * KS * C)

    return dict(
        w_mat=w_mat.astype(jnp.bfloat16),
        b_col=b_final.reshape(O, 1).astype(jnp.float32),
        shortcut=(C == O),
    )


def reference_forward(x, raw):
    """Pure-JAX replica of the PyTorch training-mode forward (NCHW/OIHW, f32)."""
    dn = lax.conv_dimension_numbers(x.shape, raw["w_3x3"].shape,
                                    ("NCHW", "OIHW", "NCHW"))

    def conv(x, w, b, pad_hw):
        y = lax.conv_general_dilated(x, w, (1, 1),
                                     [pad_hw[0], pad_hw[1]],
                                     dimension_numbers=dn)
        return y + b.reshape(1, -1, 1, 1)

    out = (conv(x, raw["w_1x3"], raw["b_1x3"], ((0, 0), (1, 1)))
           + conv(x, raw["w_3x1"], raw["b_3x1"], ((1, 1), (0, 0)))
           + conv(x, raw["w_3x3"], raw["b_3x3"], ((1, 1), (1, 1)))
           + conv(x, raw["w_1x1"], raw["b_1x1"], ((0, 0), (0, 0))))
    out = conv(out, raw["w_exp"], raw["b_exp"], ((0, 0), (0, 0)))
    out = conv(out, raw["w_shr"], raw["b_shr"], ((0, 0), (0, 0)))
    return x + out  # shortcut (channels == out_channels)


if __name__ == "__main__":
    N, C, H, W = 2, 4, 16, 16
    O = C  # out_channels == channels -> shortcut branch active

    key = jax.random.PRNGKey(0)
    kx, kp = jax.random.split(key)
    x = jax.random.normal(kx, (N, C, H, W), jnp.float32)

    raw_params = init_params(kp, C, O)
    kernel_params = fold_params(raw_params, C, O)

    out = jax.block_until_ready(repconv_forward_pallas(x, kernel_params))
    ref = jax.block_until_ready(reference_forward(x, raw_params))

    # bf16 MXU operands on the (small) conv path; residual stays f32, so
    # 1e-2 tolerance is comfortably loose.
    np.testing.assert_allclose(np.asarray(out), np.asarray(ref),
                               rtol=1e-2, atol=1e-2)
    print("KERNEL_OK")
</pallas_src>

<mosaic_0001>
module attributes {stable_mosaic.version = 11 : i64} {
  func.func @_repconv_kernel(%arg0: i32, %arg1: memref<1x4x16x16xf32, #tpu.memory_space<vmem>>, %arg2: memref<4x36xbf16, #tpu.memory_space<vmem>>, %arg3: memref<4x1xf32, #tpu.memory_space<vmem>>, %arg4: memref<1x4x256xf32, #tpu.memory_space<vmem>>, %arg5: memref<4x18x18xf32, #tpu.memory_space<vmem>>, %arg6: memref<36x256xf32, #tpu.memory_space<vmem>>) attributes {dimension_semantics = [#tpu.dimension_semantics<parallel>], iteration_bounds = array<i64: 2>, scalar_prefetch = 0 : i64, scratch_operands = 2 : i64, tpu.core_type = #tpu.core_type<tc>, window_params = [{transform_indices = @transform_0, window_bounds = array<i64: 1, 4, 16, 16>}, {pipeline_mode = #tpu.pipeline_mode<synchronous>, transform_indices = @transform_1, window_bounds = array<i64: 4, 36>}, {pipeline_mode = #tpu.pipeline_mode<synchronous>, transform_indices = @transform_2, window_bounds = array<i64: 4, 1>}, {transform_indices = @transform_3, window_bounds = array<i64: 1, 4, 256>}]} {
    %cst = arith.constant 0.000000e+00 : f32
    %0 = vector.broadcast %cst : f32 to vector<4x18x18xf32>
    %c0 = arith.constant 0 : index
    %c0_0 = arith.constant 0 : index
    %c0_1 = arith.constant 0 : index
    %1 = vector.load %arg5[%c0, %c0_0, %c0_1] : memref<4x18x18xf32, #tpu.memory_space<vmem>>, vector<4x18x18xf32>
    tpu.vector_store %arg5[%c0, %c0_0, %c0_1], %0 {strides = array<i32>} : memref<4x18x18xf32, #tpu.memory_space<vmem>>, vector<4x18x18xf32>,
    %c0_2 = arith.constant 0 : index
    %c0_3 = arith.constant 0 : index
    %c0_4 = arith.constant 0 : index
    %c0_5 = arith.constant 0 : index
    %2 = vector.load %arg1[%c0_2, %c0_3, %c0_4, %c0_5] : memref<1x4x16x16xf32, #tpu.memory_space<vmem>>, vector<1x4x16x16xf32>
    %3 = vector.shape_cast %2 : vector<1x4x16x16xf32> to vector<4x16x16xf32>
    %c0_6 = arith.constant 0 : index
    %c1 = arith.constant 1 : index
    %c1_7 = arith.constant 1 : index
    %4 = vector.load %arg5[%c0_6, %c1, %c1_7] : memref<4x18x18xf32, #tpu.memory_space<vmem>>, vector<4x16x16xf32>
    tpu.vector_store %arg5[%c0_6, %c1, %c1_7], %3 {strides = array<i32>} : memref<4x18x18xf32, #tpu.memory_space<vmem>>, vector<4x16x16xf32>,
    %c0_8 = arith.constant 0 : index
    %c0_9 = arith.constant 0 : index
    %c0_10 = arith.constant 0 : index
    %5 = vector.load %arg5[%c0_8, %c0_9, %c0_10] : memref<4x18x18xf32, #tpu.memory_space<vmem>>, vector<4x18x18xf32>
    %6 = vector.extract_strided_slice %5 {offsets = [0, 0, 0], sizes = [4, 16, 16], strides = [1, 1, 1]} : vector<4x18x18xf32> to vector<4x16x16xf32>
    %7 = vector.shape_cast %6 : vector<4x16x16xf32> to vector<4x256xf32>
    %c0_11 = arith.constant 0 : index
    %c0_12 = arith.constant 0 : index
    %8 = vector.load %arg6[%c0_11, %c0_12] : memref<36x256xf32, #tpu.memory_space<vmem>>, vector<4x256xf32>
    tpu.vector_store %arg6[%c0_11, %c0_12], %7 {strides = array<i32>} : memref<36x256xf32, #tpu.memory_space<vmem>>, vector<4x256xf32>,
    %9 = vector.extract_strided_slice %5 {offsets = [0, 0, 1], sizes = [4, 16, 16], strides = [1, 1, 1]} : vector<4x18x18xf32> to vector<4x16x16xf32>
    %10 = vector.shape_cast %9 : vector<4x16x16xf32> to vector<4x256xf32>
    %c4 = arith.constant 4 : index
    %c0_13 = arith.constant 0 : index
    %11 = vector.load %arg6[%c4, %c0_13] : memref<36x256xf32, #tpu.memory_space<vmem>>, vector<4x256xf32>
    tpu.vector_store %arg6[%c4, %c0_13], %10 {strides = array<i32>} : memref<36x256xf32, #tpu.memory_space<vmem>>, vector<4x256xf32>,
    %12 = vector.extract_strided_slice %5 {offsets = [0, 0, 2], sizes = [4, 16, 16], strides = [1, 1, 1]} : vector<4x18x18xf32> to vector<4x16x16xf32>
    %13 = vector.shape_cast %12 : vector<4x16x16xf32> to vector<4x256xf32>
    %c8 = arith.constant 8 : index
    %c0_14 = arith.constant 0 : index
    %14 = vector.load %arg6[%c8, %c0_14] : memref<36x256xf32, #tpu.memory_space<vmem>>, vector<4x256xf32>
    tpu.vector_store %arg6[%c8, %c0_14], %13 {strides = array<i32>} : memref<36x256xf32, #tpu.memory_space<vmem>>, vector<4x256xf32>,
    %15 = vector.extract_strided_slice %5 {offsets = [0, 1, 0], sizes = [4, 16, 16], strides = [1, 1, 1]} : vector<4x18x18xf32> to vector<4x16x16xf32>
    %16 = vector.shape_cast %15 : vector<4x16x16xf32> to vector<4x256xf32>
    %c12 = arith.constant 12 : index
    %c0_15 = arith.constant 0 : index
    %17 = vector.load %arg6[%c12, %c0_15] : memref<36x256xf32, #tpu.memory_space<vmem>>, vector<4x256xf32>
    tpu.vector_store %arg6[%c12, %c0_15], %16 {strides = array<i32>} : memref<36x256xf32, #tpu.memory_space<vmem>>, vector<4x256xf32>,
    %18 = vector.extract_strided_slice %5 {offsets = [0, 1, 1], sizes = [4, 16, 16], strides = [1, 1, 1]} : vector<4x18x18xf32> to vector<4x16x16xf32>
    %19 = vector.shape_cast %18 : vector<4x16x16xf32> to vector<4x256xf32>
    %c16 = arith.constant 16 : index
    %c0_16 = arith.constant 0 : index
    %20 = vector.load %arg6[%c16, %c0_16] : memref<36x256xf32, #tpu.memory_space<vmem>>, vector<4x256xf32>
    tpu.vector_store %arg6[%c16, %c0_16], %19 {strides = array<i32>} : memref<36x256xf32, #tpu.memory_space<vmem>>, vector<4x256xf32>,
    %21 = vector.extract_strided_slice %5 {offsets = [0, 1, 2], sizes = [4, 16, 16], strides = [1, 1, 1]} : vector<4x18x18xf32> to vector<4x16x16xf32>
    %22 = vector.shape_cast %21 : vector<4x16x16xf32> to vector<4x256xf32>
    %c20 = arith.constant 20 : index
    %c0_17 = arith.constant 0 : index
    %23 = vector.load %arg6[%c20, %c0_17] : memref<36x256xf32, #tpu.memory_space<vmem>>, vector<4x256xf32>
    tpu.vector_store %arg6[%c20, %c0_17], %22 {strides = array<i32>} : memref<36x256xf32, #tpu.memory_space<vmem>>, vector<4x256xf32>,
    %24 = vector.extract_strided_slice %5 {offsets = [0, 2, 0], sizes = [4, 16, 16], strides = [1, 1, 1]} : vector<4x18x18xf32> to vector<4x16x16xf32>
    %25 = vector.shape_cast %24 : vector<4x16x16xf32> to vector<4x256xf32>
    %c24 = arith.constant 24 : index
    %c0_18 = arith.constant 0 : index
    %26 = vector.load %arg6[%c24, %c0_18] : memref<36x256xf32, #tpu.memory_space<vmem>>, vector<4x256xf32>
    tpu.vector_store %arg6[%c24, %c0_18], %25 {strides = array<i32>} : memref<36x256xf32, #tpu.memory_space<vmem>>, vector<4x256xf32>,
    %27 = vector.extract_strided_slice %5 {offsets = [0, 2, 1], sizes = [4, 16, 16], strides = [1, 1, 1]} : vector<4x18x18xf32> to vector<4x16x16xf32>
    %28 = vector.shape_cast %27 : vector<4x16x16xf32> to vector<4x256xf32>
    %c28 = arith.constant 28 : index
    %c0_19 = arith.constant 0 : index
    %29 = vector.load %arg6[%c28, %c0_19] : memref<36x256xf32, #tpu.memory_space<vmem>>, vector<4x256xf32>
    tpu.vector_store %arg6[%c28, %c0_19], %28 {strides = array<i32>} : memref<36x256xf32, #tpu.memory_space<vmem>>, vector<4x256xf32>,
    %30 = vector.extract_strided_slice %5 {offsets = [0, 2, 2], sizes = [4, 16, 16], strides = [1, 1, 1]} : vector<4x18x18xf32> to vector<4x16x16xf32>
    %31 = vector.shape_cast %30 : vector<4x16x16xf32> to vector<4x256xf32>
    %c32 = arith.constant 32 : index
    %c0_20 = arith.constant 0 : index
    %32 = vector.load %arg6[%c32, %c0_20] : memref<36x256xf32, #tpu.memory_space<vmem>>, vector<4x256xf32>
    tpu.vector_store %arg6[%c32, %c0_20], %31 {strides = array<i32>} : memref<36x256xf32, #tpu.memory_space<vmem>>, vector<4x256xf32>,
    %c0_21 = arith.constant 0 : index
    %c0_22 = arith.constant 0 : index
    %33 = vector.load %arg2[%c0_21, %c0_22] : memref<4x36xbf16, #tpu.memory_space<vmem>>, vector<4x36xbf16>
    %c0_23 = arith.constant 0 : index
    %c0_24 = arith.constant 0 : index
    %34 = vector.load %arg6[%c0_23, %c0_24] : memref<36x256xf32, #tpu.memory_space<vmem>>, vector<36x256xf32>
    %35 = arith.truncf %34 : vector<36x256xf32> to vector<36x256xbf16>
    %cst_25 = arith.constant dense<0.000000e+00> : vector<4x256xf32>
    %36 = tpu.matmul %33, %35, %cst_25 {dimension_numbers = #tpu.dot_dimension_numbers<[1], [0], [0], [1], [0, 0, 1, 1], [], []>} : vector<4x36xbf16>, vector<36x256xbf16>, vector<4x256xf32> -> vector<4x256xf32>
    %c0_26 = arith.constant 0 : index
    %c0_27 = arith.constant 0 : index
    %37 = vector.load %arg3[%c0_26, %c0_27] : memref<4x1xf32, #tpu.memory_space<vmem>>, vector<4x1xf32>
    %38 = vector.broadcast %37 : vector<4x1xf32> to vector<4x256xf32>
    %39 = arith.addf %36, %38 : vector<4x256xf32>
    %40 = arith.addf %39, %19 : vector<4x256xf32>
    %c0_28 = arith.constant 0 : index
    %c0_29 = arith.constant 0 : index
    %c0_30 = arith.constant 0 : index
    %41 = vector.load %arg4[%c0_28, %c0_29, %c0_30] : memref<1x4x256xf32, #tpu.memory_space<vmem>>, vector<1x4x256xf32>
    %42 = vector.shape_cast %41 : vector<1x4x256xf32> to vector<4x256xf32>
    %43 = vector.shape_cast %40 : vector<4x256xf32> to vector<1x4x256xf32>
    tpu.vector_store %arg4[%c0_28, %c0_29, %c0_30], %43 {strides = array<i32>} : memref<1x4x256xf32, #tpu.memory_space<vmem>>, vector<1x4x256xf32>,
    return
  }
  func.func @transform_0(%arg0: i32) -> (i32, i32, i32, i32) {
    %c0_i32 = arith.constant 0 : i32
    %c0_i32_0 = arith.constant 0 : i32
    %c0_i32_1 = arith.constant 0 : i32
    %c0_i32_2 = arith.constant 0 : i32
    return %arg0, %c0_i32, %c0_i32_0, %c0_i32_1 : i32, i32, i32, i32
  }
  func.func @transform_1(%arg0: i32) -> (i32, i32) {
    %c0_i32 = arith.constant 0 : i32
    %c0_i32_0 = arith.constant 0 : i32
    %c0_i32_1 = arith.constant 0 : i32
    return %c0_i32, %c0_i32_0 : i32, i32
  }
  func.func @transform_2(%arg0: i32) -> (i32, i32) {
    %c0_i32 = arith.constant 0 : i32
    %c0_i32_0 = arith.constant 0 : i32
    %c0_i32_1 = arith.constant 0 : i32
    return %c0_i32, %c0_i32_0 : i32, i32
  }
  func.func @transform_3(%arg0: i32) -> (i32, i32, i32) {
    %c0_i32 = arith.constant 0 : i32
    %c0_i32_0 = arith.constant 0 : i32
    %c0_i32_1 = arith.constant 0 : i32
    return %arg0, %c0_i32, %c0_i32_0 : i32, i32, i32
  }
}

</mosaic_0001>

<llo_original>
// kernel: tpu_custom_call.1
$region0: #{tpu_custom_call.1}
  #allocation0 [shape = 'u32[]', space=smem, size = 0x4, offset = 0x4, fixed_abs, tag = 'smem constant byte address 0x4 - core index']
  #allocation1 [shape = 'u32[144,128]{1,0:T(1,128)}', space=vmem, size = 0x12000, scoped, tag = 'internal scratch']
  #allocation2 [shape = 'f32[4,18,18]{2,1,0:T(8,128)}', space=vmem, size = 0xc000, scoped, tag = 'scratch operand']
  #allocation3 [shape = 'f32[36,256]{1,0:T(8,128)}', space=vmem, size = 0xa000, scoped, tag = 'scratch operand']
  %s0 = inlined_call_operand.hbm [shape: f32[2,4,16,16], index: 0, kind: input, shape index: {}]
  %s1 = inlined_call_operand.vmem [shape: bf16[4,36], index: 1, kind: input, shape index: {}]
  %s2 = inlined_call_operand.vmem [shape: f32[4,1], index: 2, kind: input, shape index: {}]
  %s3 = inlined_call_operand.hbm [shape: f32[2,4,256], index: 3, kind: output, shape index: {}]
  %s4 = sld [smem:[#allocation0]]
  $region49: #{tpu_custom_call.1} parent=0
    _
  %s6 = ssub.s32 1, %s4
  %s7 = scalar_select 0, %s6, %s4
  $region1: #{tpu_custom_call.1} parent=0
    #allocation4 [shape = 'u8[65536]{0}', space=vmem, size = 0x10000, scoped, tag = 'input window, operand 0']
    #allocation5 [shape = 's32[2]{0}', space=sflag, size = 0x8, scoped, tag = 'scoped memory for tpu_custom_call.1']
    #allocation6 [shape = 's32[2]{0}', space=sflag, size = 0x8, scoped, tag = 'scoped memory for tpu_custom_call.1']
    #allocation7 [shape = 'u8[8192]{0}', space=vmem, size = 0x2000, scoped, tag = 'output window, operand 0']
    %8 = vsyncpa [#allocation5], 0
    %s9 = scalar_lea.sflag [#allocation5], 1
    %10 = vsyncpa %s9, 0
    %11 = vsyncpa [#allocation6], 0
    %s12 = scalar_lea.sflag [#allocation6], 1
    %13 = vsyncpa %s12, 0
    loop: start=0, step=1, limit=4
    $region2: #{tpu_custom_call.1} parent=1 // loop_pre_header
      _
    $region3: #{tpu_custom_call.1} parent=1 // loop_header
      %s15 = sphi 0, %s19
      %p16 = scmp.ge.s32.totalorder %s15, 4
      %s25 = sphi 0, %s27
      %s28 = sphi 0, %s25
      %s29 = sphi 0, %s28
      %s45 = sphi 0, %s29
      %s49 = sphi 0, %s49
      %s51 = sphi 0, %s49
      %s52 = sphi 0, %s51
      %s66 = sphi 0, %s52
      %s70 = sphi 0, %s70
      %s72 = sphi 0, %s70
      %s73 = sphi 0, %s72
      %s87 = sphi 0, %s73
      %s93 = sphi 0, %s95
      %s96 = sphi 0, %s93
      %s97 = sphi 0, %s96
      %s113 = sphi 0, %s97
    $region4: #{tpu_custom_call.1} parent=1 // loop_header_branch
      %18 = sbr.rel (%p16) target = $region8
    $region5: #{tpu_custom_call.1} parent=1 // loop_body
      %s20 = ssub.s32 %s15, 1
      %s21 = ssub.s32 %s15, 2
      %s22 = sadd.s32 %s15, 1
      %s23 = ssub.s32 %s15, %s22
      %p24 = scmp.eq.s32.totalorder %s23, 0
      %s26 = sadd.s32 %s25, 1
      %s27 = scalar_select %p24, %s25, %s26
      %p30 = pneg %p24
      %p31 = scmp.eq.s32.totalorder %s15, 1
      %p32 = por %p30, %p31
      %p33 = scmp.ne.s32.totalorder %s25, %s28
      %p34 = scmp.eq.s32.totalorder %s15, 0
      %p35 = por %p33, %p34
      %p36 = scmp.ne.s32.totalorder %s25, %s28
      %p37 = scmp.eq.s32.totalorder %s20, 1
      %p38 = por %p36, %p37
      %p39 = scmp.ne.s32.totalorder %s28, %s29
      %p40 = scmp.eq.s32.totalorder %s20, 0
      %p41 = por %p39, %p40
      %p42 = scmp.ne.s32.totalorder %s28, %s29
      %p43 = scmp.eq.s32.totalorder %s21, 1
      %p44 = por %p42, %p43
      %p46 = scmp.ne.s32.totalorder %s29, %s45
      %p47 = scmp.eq.s32.totalorder %s21, 0
      %p48 = por %p46, %p47
      %s50 = sadd.s32 %s49, 1
      %p53 = scmp.eq.s32.totalorder %s15, 1
      %p54 = scmp.ne.s32.totalorder %s49, %s51
      %p55 = scmp.eq.s32.totalorder %s15, 0
      %p56 = por %p54, %p55
      %p57 = scmp.ne.s32.totalorder %s49, %s51
      %p58 = scmp.eq.s32.totalorder %s20, 1
      %p59 = por %p57, %p58
      %p60 = scmp.ne.s32.totalorder %s51, %s52
      %p61 = scmp.eq.s32.totalorder %s20, 0
      %p62 = por %p60, %p61
      %p63 = scmp.ne.s32.totalorder %s51, %s52
      %p64 = scmp.eq.s32.totalorder %s21, 1
      %p65 = por %p63, %p64
      %p67 = scmp.ne.s32.totalorder %s52, %s66
      %p68 = scmp.eq.s32.totalorder %s21, 0
      %p69 = por %p67, %p68
      %s71 = sadd.s32 %s70, 1
      %p74 = scmp.eq.s32.totalorder %s15, 1
      %p75 = scmp.ne.s32.totalorder %s70, %s72
      %p76 = scmp.eq.s32.totalorder %s15, 0
      %p77 = por %p75, %p76
      %p78 = scmp.ne.s32.totalorder %s70, %s72
      %p79 = scmp.eq.s32.totalorder %s20, 1
      %p80 = por %p78, %p79
      %p81 = scmp.ne.s32.totalorder %s72, %s73
      %p82 = scmp.eq.s32.totalorder %s20, 0
      %p83 = por %p81, %p82
      %p84 = scmp.ne.s32.totalorder %s72, %s73
      %p85 = scmp.eq.s32.totalorder %s21, 1
      %p86 = por %p84, %p85
      %p88 = scmp.ne.s32.totalorder %s73, %s87
      %p89 = scmp.eq.s32.totalorder %s21, 0
      %p90 = por %p88, %p89
      %s91 = ssub.s32 %s15, %s22
      %p92 = scmp.eq.s32.totalorder %s91, 0
      %s94 = sadd.s32 %s93, 1
      %s95 = scalar_select %p92, %s93, %s94
      %p98 = pneg %p92
      %p99 = scmp.eq.s32.totalorder %s15, 1
      %p100 = por %p98, %p99
      %p101 = scmp.ne.s32.totalorder %s93, %s96
      %p102 = scmp.eq.s32.totalorder %s15, 0
      %p103 = por %p101, %p102
      %p104 = scmp.ne.s32.totalorder %s93, %s96
      %p105 = scmp.eq.s32.totalorder %s20, 1
      %p106 = por %p104, %p105
      %p107 = scmp.ne.s32.totalorder %s96, %s97
      %p108 = scmp.eq.s32.totalorder %s20, 0
      %p109 = por %p107, %p108
      %p110 = scmp.ne.s32.totalorder %s96, %s97
      %p111 = scmp.eq.s32.totalorder %s21, 1
      %p112 = por %p110, %p111
      %p114 = scmp.ne.s32.totalorder %s97, %s113
      %p115 = scmp.eq.s32.totalorder %s21, 0
      %p116 = por %p114, %p115
      %p117 = scmp.le.s32.totalorder 1, %s15
      %p118 = scmp.lt.s32.totalorder %s15, 3
      %p119 = pnand %p117, %p118
      %p120 = pneg %p119
      // Predicated region
      $region9: #{tpu_custom_call.1} parent=5 // pred_check
        _
      $region10: #{tpu_custom_call.1} parent=5 // pred_check_branch
        %122 = sbr.rel (%p119) target = $region12
      $region11: #{tpu_custom_call.1} parent=5 // pred_region
        %s123 = ssub.s32 %s15, 1
        // Predicated region
        $region13: #{tpu_custom_call.1} parent=11 // pred_check
          %p124 = pneg %p62
        $region14: #{tpu_custom_call.1} parent=11 // pred_check_branch
          %126 = sbr.rel (%p124) target = $region16
        $region15: #{tpu_custom_call.1} parent=11 // pred_region
          _
        $region16: #{tpu_custom_call.1} parent=11 // pred_fallthru
          _
        // Predicated region
        $region17: #{tpu_custom_call.1} parent=11 // pred_check
          %p127 = pneg %p83
        $region18: #{tpu_custom_call.1} parent=11 // pred_check_branch
          %129 = sbr.rel (%p127) target = $region20
        $region19: #{tpu_custom_call.1} parent=11 // pred_region
          _
        $region20: #{tpu_custom_call.1} parent=11 // pred_fallthru
          _
      $region12: #{tpu_custom_call.1} parent=5 // pred_fallthru
        _
      %p130 = scmp.lt.s32.totalorder %s15, 2
      // Predicated region
      $region21: #{tpu_custom_call.1} parent=5 // pred_check
        %p131 = pneg %p130
      $region22: #{tpu_custom_call.1} parent=5 // pred_check_branch
        %133 = sbr.rel (%p131) target = $region24
      $region23: #{tpu_custom_call.1} parent=5 // pred_region
        // Predicated region
        $region25: #{tpu_custom_call.1} parent=23 // pred_check
          %p134 = pneg %p35
        $region26: #{tpu_custom_call.1} parent=23 // pred_check_branch
          %136 = sbr.rel (%p134) target = $region28
        $region27: #{tpu_custom_call.1} parent=23 // pred_region
          %s137 = sand.u32 %s25, 1
          %s138 = scalar_lea.sflag [#allocation5], %s137
          %s139 = sand.u32 %s25, 1
          %s140 = smul.addr %s139, 64
          %s141 = scalar_lea.vmem [#allocation4], %s140
          %s143 = ssub.s32 1024, 1024
          %144 = vsyncadd %s138, %s143
          %s145 = smul.addr %s15, 8
          %s146 = smul.addr %s145, 128
          %s147 = scalar_lea.hbm %s0, %s146
          %s148 = sshll.u32 %s141, 4
          %s149 = int_to_ptr.vmem [resolvable:$true] %s148
          %154 = dma.hbm_to_vmem [thread:$0]  %s147, 1024, %s149, %s138, 128, 128, 8
        $region28: #{tpu_custom_call.1} parent=23 // pred_fallthru
          _
      $region24: #{tpu_custom_call.1} parent=5 // pred_fallthru
        _
      %p155 = scmp.le.s32.totalorder 1, %s15
      %p156 = scmp.lt.s32.totalorder %s15, 3
      %p157 = pnand %p155, %p156
      %p158 = pneg %p157
      // Predicated region
      $region29: #{tpu_custom_call.1} parent=5 // pred_check
        _
      $region30: #{tpu_custom_call.1} parent=5 // pred_check_branch
        %160 = sbr.rel (%p157) target = $region32
      $region31: #{tpu_custom_call.1} parent=5 // pred_region
        %s161 = ssub.s32 %s15, 1
        %s162 = sand.u32 %s28, 1
        %s163 = scalar_lea.sflag [#allocation5], %s162
        %s164 = sand.u32 %s28, 1
        %s165 = smul.addr %s164, 64
        %s166 = scalar_lea.vmem [#allocation4], %s165
        // Predicated region
        $region33: #{tpu_custom_call.1} parent=31 // pred_check
          %p167 = pneg %p41
        $region34: #{tpu_custom_call.1} parent=31 // pred_check_branch
          %169 = sbr.rel (%p167) target = $region36
        $region35: #{tpu_custom_call.1} parent=31 // pred_region
          %170 = dma.done %s163, 1024
        $region36: #{tpu_custom_call.1} parent=31 // pred_fallthru
          _
        %s171 = sand.u32 %s28, 1
        %s172 = scalar_lea.sflag [#allocation5], %s171
        %s173 = sand.u32 %s28, 1
        %s174 = smul.addr %s173, 64
        %s175 = scalar_lea.vmem [#allocation4], %s174
        %p176 = pneg %p41
        %p177 = pneg %p38
        %p178 = pneg %p62
        %p179 = pneg %p59
        %p180 = pneg %p83
        %p181 = pneg %p80
        %p182 = pneg %p109
        %p183 = pneg %p106
        %s184 = sand.u32 %s96, 1
        %s185 = scalar_lea.sflag [#allocation6], %s184
        %s186 = sand.u32 %s96, 1
        %s187 = smul.addr %s186, 8
        %s188 = scalar_lea.vmem [#allocation7], %s187
        %vm190 = vcmask 146432
        %191 = vst.msk [vmem:[#allocation2] sm:$0xff] %vm190, 0.0
        %192 = vst.msk [vmem:[#allocation2 + $0x8] sm:$0xff] %vm190, 0.0
        %vm193 = vcmask 140288
        %194 = vst.msk [vmem:[#allocation2 + $0x10] sm:$0x3] %vm193, 0.0
        %195 = vst.msk [vmem:[#allocation2 + $0x18] sm:$0xff] %vm190, 0.0
        %196 = vst.msk [vmem:[#allocation2 + $0x20] sm:$0xff] %vm190, 0.0
        %197 = vst.msk [vmem:[#allocation2 + $0x28] sm:$0x3] %vm193, 0.0
        %198 = vst.msk [vmem:[#allocation2 + $0x30] sm:$0xff] %vm190, 0.0
        %199 = vst.msk [vmem:[#allocation2 + $0x38] sm:$0xff] %vm190, 0.0
        %200 = vst.msk [vmem:[#allocation2 + $0x40] sm:$0x3] %vm193, 0.0
        %201 = vst.msk [vmem:[#allocation2 + $0x48] sm:$0xff] %vm190, 0.0
        %202 = vst.msk [vmem:[#allocation2 + $0x50] sm:$0xff] %vm190, 0.0
        %203 = vst.msk [vmem:[#allocation2 + $0x58] sm:$0x3] %vm193, 0.0
        %v204 = vld [vmem:[%s166] sm:$0xff]
        %v205 = vld [vmem:[%s166 + $0x8] sm:$0xff]
        %v206 = vld [vmem:[%s166 + $0x10] sm:$0xff]
        %v207 = vld [vmem:[%s166 + $0x18] sm:$0xff]
        %v208 = vld [vmem:[%s166 + $0x20] sm:$0xff]
        %v209 = vld [vmem:[%s166 + $0x28] sm:$0xff]
        %v210 = vld [vmem:[%s166 + $0x30] sm:$0xff]
        %v211 = vld [vmem:[%s166 + $0x38] sm:$0xff]
        %220 = vrot.lane.b32.xlu0 %v204, 1
        %v221 = vpop.permute.xlu0 %220
        %222 = vrot.lane.b32.xlu0 %v205, 1
        %v223 = vpop.permute.xlu0 %222
        %224 = vrot.lane.b32.xlu0 %v206, 1
        %v225 = vpop.permute.xlu0 %224
        %226 = vrot.lane.b32.xlu0 %v207, 1
        %v227 = vpop.permute.xlu0 %226
        %228 = vrot.lane.b32.xlu0 %v208, 1
        %v229 = vpop.permute.xlu0 %228
        %230 = vrot.lane.b32.xlu0 %v209, 1
        %v231 = vpop.permute.xlu0 %230
        %232 = vrot.lane.b32.xlu0 %v210, 1
        %v233 = vpop.permute.xlu0 %232
        %234 = vrot.lane.b32.xlu0 %v211, 1
        %v235 = vpop.permute.xlu0 %234
        %vm244 = vcmask 138248
        %245 = vst.msk [vmem:[#allocation2 + $0x1] sm:$0xff] %vm244, %v221
        %246 = vst.msk [vmem:[#allocation2 + $0x9] sm:$0xff] %vm244, %v223
        %247 = vst.msk [vmem:[#allocation2 + $0x19] sm:$0xff] %vm244, %v225
        %248 = vst.msk [vmem:[#allocation2 + $0x21] sm:$0xff] %vm244, %v227
        %249 = vst.msk [vmem:[#allocation2 + $0x31] sm:$0xff] %vm244, %v229
        %250 = vst.msk [vmem:[#allocation2 + $0x39] sm:$0xff] %vm244, %v231
        %251 = vst.msk [vmem:[#allocation2 + $0x49] sm:$0xff] %vm244, %v233
        %252 = vst.msk [vmem:[#allocation2 + $0x51] sm:$0xff] %vm244, %v235
        %v253 = vld [vmem:[#allocation2] sm:$0xff]
        %v254 = vld [vmem:[#allocation2 + $0x8] sm:$0xff]
        %v255 = vld [vmem:[#allocation2 + $0x10] sm:$0x3]
        %v256 = vld [vmem:[#allocation2 + $0x18] sm:$0xff]
        %v257 = vld [vmem:[#allocation2 + $0x20] sm:$0xff]
        %v258 = vld [vmem:[#allocation2 + $0x28] sm:$0x3]
        %v259 = vld [vmem:[#allocation2 + $0x30] sm:$0xff]
        %v260 = vld [vmem:[#allocation2 + $0x38] sm:$0xff]
        %v261 = vld [vmem:[#allocation2 + $0x40] sm:$0x3]
        %v262 = vld [vmem:[#allocation2 + $0x48] sm:$0xff]
        %v263 = vld [vmem:[#allocation2 + $0x50] sm:$0xff]
        %v264 = vld [vmem:[#allocation2 + $0x58] sm:$0x3]
        %v265 = vcombine.low %v253, %v259
        %v266 = vcombine.high %v253, %v259
        %v268 = vunpack.c.l.s4 1983009808
        %v269 = vunpack.c.0.s8 %v268
        %v270 = vlaneseq
        %v271 = vshrl.u32 %v270, 7
        %v272 = vsub.s32 %v269, %v271
        %v273 = vrot.slane %v265, %v272
        %v275 = vunpack.c.l.s4 1983009808
        %v276 = vunpack.c.0.s8 %v275
        %v277 = vlaneseq
        %v278 = vshrl.u32 %v277, 7
        %v279 = vsub.s32 %v276, %v278
        %v280 = vrot.slane %v266, %v279
        %v281 = vcombine.low %v256, %v262
        %v282 = vcombine.high %v256, %v262
        %v284 = vunpack.c.l.s4 1983009808
        %v285 = vunpack.c.0.s8 %v284
        %v286 = vlaneseq
        %v287 = vshrl.u32 %v286, 7
        %v288 = vsub.s32 %v285, %v287
        %v289 = vrot.slane %v281, %v288
        %v291 = vunpack.c.l.s4 1983009808
        %v292 = vunpack.c.0.s8 %v291
        %v293 = vlaneseq
        %v294 = vshrl.u32 %v293, 7
        %v295 = vsub.s32 %v292, %v294
        %v296 = vrot.slane %v282, %v295
        %v297 = vcombine.low %v273, %v289
        %v298 = vcombine.high %v273, %v289
        %v300 = vunpack.c.l.s4 1934713408
        %v301 = vunpack.c.0.s8 %v300
        %v302 = vlaneseq
        %v303 = vshrl.u32 %v302, 7
        %v304 = vsub.s32 %v301, %v303
        %v305 = vrot.slane %v297, %v304
        %v307 = vunpack.c.l.s4 1934713408
        %v308 = vunpack.c.0.s8 %v307
        %v309 = vlaneseq
        %v310 = vshrl.u32 %v309, 7
        %v311 = vsub.s32 %v308, %v310
        %v312 = vrot.slane %v298, %v311
        %v313 = vcombine.low %v280, %v296
        %v314 = vcombine.high %v280, %v296
        %v316 = vunpack.c.l.s4 1934713408
        %v317 = vunpack.c.0.s8 %v316
        %v318 = vlaneseq
        %v319 = vshrl.u32 %v318, 7
        %v320 = vsub.s32 %v317, %v319
        %v321 = vrot.slane %v313, %v320
        %v323 = vunpack.c.l.s4 1934713408
        %v324 = vunpack.c.0.s8 %v323
        %v325 = vlaneseq
        %v326 = vshrl.u32 %v325, 7
        %v327 = vsub.s32 %v324, %v326
        %v328 = vrot.slane %v314, %v327
        %v329 = vcombine.high %v305, 0.0
        %v330 = vcombine.high %v312, 0.0
        %v331 = vcombine.high %v321, 0.0
        %v332 = vcombine.high %v328, 0.0
        %v333 = vcombine.low %v254, %v260
        %v334 = vcombine.high %v254, %v260
        %v336 = vunpack.c.l.s4 1983009808
        %v337 = vunpack.c.0.s8 %v336
        %v338 = vlaneseq
        %v339 = vshrl.u32 %v338, 7
        %v340 = vsub.s32 %v337, %v339
        %v341 = vrot.slane %v333, %v340
        %v343 = vunpack.c.l.s4 1983009808
        %v344 = vunpack.c.0.s8 %v343
        %v345 = vlaneseq
        %v346 = vshrl.u32 %v345, 7
        %v347 = vsub.s32 %v344, %v346
        %v348 = vrot.slane %v334, %v347
        %v349 = vcombine.low %v257, %v263
        %v350 = vcombine.high %v257, %v263
        %v352 = vunpack.c.l.s4 1983009808
        %v353 = vunpack.c.0.s8 %v352
        %v354 = vlaneseq
        %v355 = vshrl.u32 %v354, 7
        %v356 = vsub.s32 %v353, %v355
        %v357 = vrot.slane %v349, %v356
        %v359 = vunpack.c.l.s4 1983009808
        %v360 = vunpack.c.0.s8 %v359
        %v361 = vlaneseq
        %v362 = vshrl.u32 %v361, 7
        %v363 = vsub.s32 %v360, %v362
        %v364 = vrot.slane %v350, %v363
        %v365 = vcombine.low %v341, %v357
        %v366 = vcombine.high %v341, %v357
        %v368 = vunpack.c.l.s4 1934713408
        %v369 = vunpack.c.0.s8 %v368
        %v370 = vlaneseq
        %v371 = vshrl.u32 %v370, 7
        %v372 = vsub.s32 %v369, %v371
        %v373 = vrot.slane %v365, %v372
        %v375 = vunpack.c.l.s4 1934713408
        %v376 = vunpack.c.0.s8 %v375
        %v377 = vlaneseq
        %v378 = vshrl.u32 %v377, 7
        %v379 = vsub.s32 %v376, %v378
        %v380 = vrot.slane %v366, %v379
        %v381 = vcombine.low %v348, %v364
        %v382 = vcombine.high %v348, %v364
        %v384 = vunpack.c.l.s4 1934713408
        %v385 = vunpack.c.0.s8 %v384
        %v386 = vlaneseq
        %v387 = vshrl.u32 %v386, 7
        %v388 = vsub.s32 %v385, %v387
        %v389 = vrot.slane %v381, %v388
        %v391 = vunpack.c.l.s4 1934713408
        %v392 = vunpack.c.0.s8 %v391
        %v393 = vlaneseq
        %v394 = vshrl.u32 %v393, 7
        %v395 = vsub.s32 %v392, %v394
        %v396 = vrot.slane %v382, %v395
        %v397 = vcombine.high %v373, 0.0
        %v398 = vcombine.high %v380, 0.0
        %v399 = vcombine.high %v389, 0.0
        %v400 = vcombine.high %v396, 0.0
        %402 = vrot.lane.b32.xlu0 %v329, 16
        %v403 = vpop.permute.xlu0 %402
        %406 = vrot.lane.b32.xlu0 %v312, 32
        %v407 = vpop.permute.xlu0 %406
        %410 = vrot.lane.b32.xlu0 %v330, 48
        %v411 = vpop.permute.xlu0 %410
        %414 = vrot.lane.b32.xlu0 %v321, 64
        %v415 = vpop.permute.xlu0 %414
        %418 = vrot.lane.b32.xlu0 %v331, 80
        %v419 = vpop.permute.xlu0 %418
        %422 = vrot.lane.b32.xlu0 %v328, 96
        %v423 = vpop.permute.xlu0 %422
        %426 = vrot.lane.b32.xlu0 %v332, 112
        %v427 = vpop.permute.xlu0 %426
        %430 = vrot.lane.b32.xlu0 %v397, 16
        %v431 = vpop.permute.xlu0 %430
        %434 = vrot.lane.b32.xlu0 %v380, 32
        %v435 = vpop.permute.xlu0 %434
        %438 = vrot.lane.b32.xlu0 %v398, 48
        %v439 = vpop.permute.xlu0 %438
        %442 = vrot.lane.b32.xlu0 %v389, 64
        %v443 = vpop.permute.xlu0 %442
        %446 = vrot.lane.b32.xlu0 %v399, 80
        %v447 = vpop.permute.xlu0 %446
        %450 = vrot.lane.b32.xlu0 %v396, 96
        %v451 = vpop.permute.xlu0 %450
        %454 = vrot.lane.b32.xlu0 %v400, 112
        %v455 = vpop.permute.xlu0 %454
        %vm457 = vcmask 130048
        %v458 = vsel %vm457, %v305, %v403
        %vm459 = vcmask 261120
        %v460 = vsel %vm459, %v458, %v407
        %vm461 = vcmask 392192
        %v462 = vsel %vm461, %v460, %v411
        %vm463 = vcmask 523264
        %v464 = vsel %vm463, %v462, %v415
        %vm465 = vcmask 654336
        %v466 = vsel %vm465, %v464, %v419
        %vm467 = vcmask 785408
        %v468 = vsel %vm467, %v466, %v423
        %vm469 = vcmask 916480
        %v470 = vsel %vm469, %v468, %v427
        %v471 = vsel %vm457, %v373, %v431
        %v472 = vsel %vm459, %v471, %v435
        %v473 = vsel %vm461, %v472, %v439
        %v474 = vsel %vm463, %v473, %v443
        %v475 = vsel %vm465, %v474, %v447
        %v476 = vsel %vm467, %v475, %v451
        %v477 = vsel %vm469, %v476, %v455
        %478 = vst [vmem:[#allocation3] sm:$0xf] %v470
        %479 = vst [vmem:[#allocation3 + $0x8] sm:$0xf] %v477
        %488 = vrot.lane.b32.xlu0 %v253, 127
        %v489 = vpop.permute.xlu0 %488
        %490 = vrot.lane.b32.xlu0 %v254, 127
        %v491 = vpop.permute.xlu0 %490
        %492 = vrot.lane.b32.xlu0 %v256, 127
        %v493 = vpop.permute.xlu0 %492
        %494 = vrot.lane.b32.xlu0 %v257, 127
        %v495 = vpop.permute.xlu0 %494
        %496 = vrot.lane.b32.xlu0 %v259, 127
        %v497 = vpop.permute.xlu0 %496
        %498 = vrot.lane.b32.xlu0 %v260, 127
        %v499 = vpop.permute.xlu0 %498
        %500 = vrot.lane.b32.xlu0 %v262, 127
        %v501 = vpop.permute.xlu0 %500
        %502 = vrot.lane.b32.xlu0 %v263, 127
        %v503 = vpop.permute.xlu0 %502
        %v512 = vcombine.low %v489, %v497
        %v513 = vcombine.high %v489, %v497
        %v515 = vunpack.c.l.s4 1983009808
        %v516 = vunpack.c.0.s8 %v515
        %v517 = vlaneseq
        %v518 = vshrl.u32 %v517, 7
        %v519 = vsub.s32 %v516, %v518
        %v520 = vrot.slane %v512, %v519
        %v522 = vunpack.c.l.s4 1983009808
        %v523 = vunpack.c.0.s8 %v522
        %v524 = vlaneseq
        %v525 = vshrl.u32 %v524, 7
        %v526 = vsub.s32 %v523, %v525
        %v527 = vrot.slane %v513, %v526
        %v528 = vcombine.low %v493, %v501
        %v529 = vcombine.high %v493, %v501
        %v531 = vunpack.c.l.s4 1983009808
        %v532 = vunpack.c.0.s8 %v531
        %v533 = vlaneseq
        %v534 = vshrl.u32 %v533, 7
        %v535 = vsub.s32 %v532, %v534
        %v536 = vrot.slane %v528, %v535
        %v538 = vunpack.c.l.s4 1983009808
        %v539 = vunpack.c.0.s8 %v538
        %v540 = vlaneseq
        %v541 = vshrl.u32 %v540, 7
        %v542 = vsub.s32 %v539, %v541
        %v543 = vrot.slane %v529, %v542
        %v544 = vcombine.low %v520, %v536
        %v545 = vcombine.high %v520, %v536
        %v547 = vunpack.c.l.s4 1934713408
        %v548 = vunpack.c.0.s8 %v547
        %v549 = vlaneseq
        %v550 = vshrl.u32 %v549, 7
        %v551 = vsub.s32 %v548, %v550
        %v552 = vrot.slane %v544, %v551
        %v554 = vunpack.c.l.s4 1934713408
        %v555 = vunpack.c.0.s8 %v554
        %v556 = vlaneseq
        %v557 = vshrl.u32 %v556, 7
        %v558 = vsub.s32 %v555, %v557
        %v559 = vrot.slane %v545, %v558
        %v560 = vcombine.low %v527, %v543
        %v561 = vcombine.high %v527, %v543
        %v563 = vunpack.c.l.s4 1934713408
        %v564 = vunpack.c.0.s8 %v563
        %v565 = vlaneseq
        %v566 = vshrl.u32 %v565, 7
        %v567 = vsub.s32 %v564, %v566
        %v568 = vrot.slane %v560, %v567
        %v570 = vunpack.c.l.s4 1934713408
        %v571 = vunpack.c.0.s8 %v570
        %v572 = vlaneseq
        %v573 = vshrl.u32 %v572, 7
        %v574 = vsub.s32 %v571, %v573
        %v575 = vrot.slane %v561, %v574
        %v576 = vcombine.high %v552, 0.0
        %v577 = vcombine.high %v559, 0.0
        %v578 = vcombine.high %v568, 0.0
        %v579 = vcombine.high %v575, 0.0
        %v580 = vcombine.low %v491, %v499
        %v581 = vcombine.high %v491, %v499
        %v583 = vunpack.c.l.s4 1983009808
        %v584 = vunpack.c.0.s8 %v583
        %v585 = vlaneseq
        %v586 = vshrl.u32 %v585, 7
        %v587 = vsub.s32 %v584, %v586
        %v588 = vrot.slane %v580, %v587
        %v590 = vunpack.c.l.s4 1983009808
        %v591 = vunpack.c.0.s8 %v590
        %v592 = vlaneseq
        %v593 = vshrl.u32 %v592, 7
        %v594 = vsub.s32 %v591, %v593
        %v595 = vrot.slane %v581, %v594
        %v596 = vcombine.low %v495, %v503
        %v597 = vcombine.high %v495, %v503
        %v599 = vunpack.c.l.s4 1983009808
        %v600 = vunpack.c.0.s8 %v599
        %v601 = vlaneseq
        %v602 = vshrl.u32 %v601, 7
        %v603 = vsub.s32 %v600, %v602
        %v604 = vrot.slane %v596, %v603
        %v606 = vunpack.c.l.s4 1983009808
        %v607 = vunpack.c.0.s8 %v606
        %v608 = vlaneseq
        %v609 = vshrl.u32 %v608, 7
        %v610 = vsub.s32 %v607, %v609
        %v611 = vrot.slane %v597, %v610
        %v612 = vcombine.low %v588, %v604
        %v613 = vcombine.high %v588, %v604
        %v615 = vunpack.c.l.s4 1934713408
        %v616 = vunpack.c.0.s8 %v615
        %v617 = vlaneseq
        %v618 = vshrl.u32 %v617, 7
        %v619 = vsub.s32 %v616, %v618
        %v620 = vrot.slane %v612, %v619
        %v622 = vunpack.c.l.s4 1934713408
        %v623 = vunpack.c.0.s8 %v622
        %v624 = vlaneseq
        %v625 = vshrl.u32 %v624, 7
        %v626 = vsub.s32 %v623, %v625
        %v627 = vrot.slane %v613, %v626
        %v628 = vcombine.low %v595, %v611
        %v629 = vcombine.high %v595, %v611
        %v631 = vunpack.c.l.s4 1934713408
        %v632 = vunpack.c.0.s8 %v631
        %v633 = vlaneseq
        %v634 = vshrl.u32 %v633, 7
        %v635 = vsub.s32 %v632, %v634
        %v636 = vrot.slane %v628, %v635
        %v638 = vunpack.c.l.s4 1934713408
        %v639 = vunpack.c.0.s8 %v638
        %v640 = vlaneseq
        %v641 = vshrl.u32 %v640, 7
        %v642 = vsub.s32 %v639, %v641
        %v643 = vrot.slane %v629, %v642
        %v644 = vcombine.high %v620, 0.0
        %v645 = vcombine.high %v627, 0.0
        %v646 = vcombine.high %v636, 0.0
        %v647 = vcombine.high %v643, 0.0
        %649 = vrot.lane.b32.xlu0 %v576, 16
        %v650 = vpop.permute.xlu0 %649
        %653 = vrot.lane.b32.xlu0 %v559, 32
        %v654 = vpop.permute.xlu0 %653
        %657 = vrot.lane.b32.xlu0 %v577, 48
        %v658 = vpop.permute.xlu0 %657
        %661 = vrot.lane.b32.xlu0 %v568, 64
        %v662 = vpop.permute.xlu0 %661
        %665 = vrot.lane.b32.xlu0 %v578, 80
        %v666 = vpop.permute.xlu0 %665
        %669 = vrot.lane.b32.xlu0 %v575, 96
        %v670 = vpop.permute.xlu0 %669
        %673 = vrot.lane.b32.xlu0 %v579, 112
        %v674 = vpop.permute.xlu0 %673
        %677 = vrot.lane.b32.xlu0 %v644, 16
        %v678 = vpop.permute.xlu0 %677
        %681 = vrot.lane.b32.xlu0 %v627, 32
        %v682 = vpop.permute.xlu0 %681
        %685 = vrot.lane.b32.xlu0 %v645, 48
        %v686 = vpop.permute.xlu0 %685
        %689 = vrot.lane.b32.xlu0 %v636, 64
        %v690 = vpop.permute.xlu0 %689
        %693 = vrot.lane.b32.xlu0 %v646, 80
        %v694 = vpop.permute.xlu0 %693
        %697 = vrot.lane.b32.xlu0 %v643, 96
        %v698 = vpop.permute.xlu0 %697
        %701 = vrot.lane.b32.xlu0 %v647, 112
        %v702 = vpop.permute.xlu0 %701
        %v704 = vsel %vm457, %v552, %v650
        %v705 = vsel %vm459, %v704, %v654
        %v706 = vsel %vm461, %v705, %v658
        %v707 = vsel %vm463, %v706, %v662
        %v708 = vsel %vm465, %v707, %v666
        %v709 = vsel %vm467, %v708, %v670
        %v710 = vsel %vm469, %v709, %v674
        %v711 = vsel %vm457, %v620, %v678
        %v712 = vsel %vm459, %v711, %v682
        %v713 = vsel %vm461, %v712, %v686
        %v714 = vsel %vm463, %v713, %v690
        %v715 = vsel %vm465, %v714, %v694
        %v716 = vsel %vm467, %v715, %v698
        %v717 = vsel %vm469, %v716, %v702
        %v720 = vrot.slane %v710, 4
        %v721 = vrot.slane %v717, 4
        %724 = vst [vmem:[#allocation3] sm:$0xf0] %v720
        %725 = vst [vmem:[#allocation3 + $0x8] sm:$0xf0] %v721
        %726 = vrot.lane.b32.xlu0 %v253, 126
        %v727 = vpop.permute.xlu0 %726
        %728 = vrot.lane.b32.xlu0 %v254, 126
        %v729 = vpop.permute.xlu0 %728
        %730 = vrot.lane.b32.xlu0 %v256, 126
        %v731 = vpop.permute.xlu0 %730
        %732 = vrot.lane.b32.xlu0 %v257, 126
        %v733 = vpop.permute.xlu0 %732
        %734 = vrot.lane.b32.xlu0 %v259, 126
        %v735 = vpop.permute.xlu0 %734
        %736 = vrot.lane.b32.xlu0 %v260, 126
        %v737 = vpop.permute.xlu0 %736
        %738 = vrot.lane.b32.xlu0 %v262, 126
        %v739 = vpop.permute.xlu0 %738
        %740 = vrot.lane.b32.xlu0 %v263, 126
        %v741 = vpop.permute.xlu0 %740
        %v750 = vcombine.low %v727, %v735
        %v751 = vcombine.high %v727, %v735
        %v753 = vunpack.c.l.s4 1983009808
        %v754 = vunpack.c.0.s8 %v753
        %v755 = vlaneseq
        %v756 = vshrl.u32 %v755, 7
        %v757 = vsub.s32 %v754, %v756
        %v758 = vrot.slane %v750, %v757
        %v760 = vunpack.c.l.s4 1983009808
        %v761 = vunpack.c.0.s8 %v760
        %v762 = vlaneseq
        %v763 = vshrl.u32 %v762, 7
        %v764 = vsub.s32 %v761, %v763
        %v765 = vrot.slane %v751, %v764
        %v766 = vcombine.low %v731, %v739
        %v767 = vcombine.high %v731, %v739
        %v769 = vunpack.c.l.s4 1983009808
        %v770 = vunpack.c.0.s8 %v769
        %v771 = vlaneseq
        %v772 = vshrl.u32 %v771, 7
        %v773 = vsub.s32 %v770, %v772
        %v774 = vrot.slane %v766, %v773
        %v776 = vunpack.c.l.s4 1983009808
        %v777 = vunpack.c.0.s8 %v776
        %v778 = vlaneseq
        %v779 = vshrl.u32 %v778, 7
        %v780 = vsub.s32 %v777, %v779
        %v781 = vrot.slane %v767, %v780
        %v782 = vcombine.low %v758, %v774
        %v783 = vcombine.high %v758, %v774
        %v785 = vunpack.c.l.s4 1934713408
        %v786 = vunpack.c.0.s8 %v785
        %v787 = vlaneseq
        %v788 = vshrl.u32 %v787, 7
        %v789 = vsub.s32 %v786, %v788
        %v790 = vrot.slane %v782, %v789
        %v792 = vunpack.c.l.s4 1934713408
        %v793 = vunpack.c.0.s8 %v792
        %v794 = vlaneseq
        %v795 = vshrl.u32 %v794, 7
        %v796 = vsub.s32 %v793, %v795
        %v797 = vrot.slane %v783, %v796
        %v798 = vcombine.low %v765, %v781
        %v799 = vcombine.high %v765, %v781
        %v801 = vunpack.c.l.s4 1934713408
        %v802 = vunpack.c.0.s8 %v801
        %v803 = vlaneseq
        %v804 = vshrl.u32 %v803, 7
        %v805 = vsub.s32 %v802, %v804
        %v806 = vrot.slane %v798, %v805
        %v808 = vunpack.c.l.s4 1934713408
        %v809 = vunpack.c.0.s8 %v808
        %v810 = vlaneseq
        %v811 = vshrl.u32 %v810, 7
        %v812 = vsub.s32 %v809, %v811
        %v813 = vrot.slane %v799, %v812
        %v814 = vcombine.high %v790, 0.0
        %v815 = vcombine.high %v797, 0.0
        %v816 = vcombine.high %v806, 0.0
        %v817 = vcombine.high %v813, 0.0
        %v818 = vcombine.low %v729, %v737
        %v819 = vcombine.high %v729, %v737
        %v821 = vunpack.c.l.s4 1983009808
        %v822 = vunpack.c.0.s8 %v821
        %v823 = vlaneseq
        %v824 = vshrl.u32 %v823, 7
        %v825 = vsub.s32 %v822, %v824
        %v826 = vrot.slane %v818, %v825
        %v828 = vunpack.c.l.s4 1983009808
        %v829 = vunpack.c.0.s8 %v828
        %v830 = vlaneseq
        %v831 = vshrl.u32 %v830, 7
        %v832 = vsub.s32 %v829, %v831
        %v833 = vrot.slane %v819, %v832
        %v834 = vcombine.low %v733, %v741
        %v835 = vcombine.high %v733, %v741
        %v837 = vunpack.c.l.s4 1983009808
        %v838 = vunpack.c.0.s8 %v837
        %v839 = vlaneseq
        %v840 = vshrl.u32 %v839, 7
        %v841 = vsub.s32 %v838, %v840
        %v842 = vrot.slane %v834, %v841
        %v844 = vunpack.c.l.s4 1983009808
        %v845 = vunpack.c.0.s8 %v844
        %v846 = vlaneseq
        %v847 = vshrl.u32 %v846, 7
        %v848 = vsub.s32 %v845, %v847
        %v849 = vrot.slane %v835, %v848
        %v850 = vcombine.low %v826, %v842
        %v851 = vcombine.high %v826, %v842
        %v853 = vunpack.c.l.s4 1934713408
        %v854 = vunpack.c.0.s8 %v853
        %v855 = vlaneseq
        %v856 = vshrl.u32 %v855, 7
        %v857 = vsub.s32 %v854, %v856
        %v858 = vrot.slane %v850, %v857
        %v860 = vunpack.c.l.s4 1934713408
        %v861 = vunpack.c.0.s8 %v860
        %v862 = vlaneseq
        %v863 = vshrl.u32 %v862, 7
        %v864 = vsub.s32 %v861, %v863
        %v865 = vrot.slane %v851, %v864
        %v866 = vcombine.low %v833, %v849
        %v867 = vcombine.high %v833, %v849
        %v869 = vunpack.c.l.s4 1934713408
        %v870 = vunpack.c.0.s8 %v869
        %v871 = vlaneseq
        %v872 = vshrl.u32 %v871, 7
        %v873 = vsub.s32 %v870, %v872
        %v874 = vrot.slane %v866, %v873
        %v876 = vunpack.c.l.s4 1934713408
        %v877 = vunpack.c.0.s8 %v876
        %v878 = vlaneseq
        %v879 = vshrl.u32 %v878, 7
        %v880 = vsub.s32 %v877, %v879
        %v881 = vrot.slane %v867, %v880
        %v882 = vcombine.high %v858, 0.0
        %v883 = vcombine.high %v865, 0.0
        %v884 = vcombine.high %v874, 0.0
        %v885 = vcombine.high %v881, 0.0
        %887 = vrot.lane.b32.xlu0 %v814, 16
        %v888 = vpop.permute.xlu0 %887
        %891 = vrot.lane.b32.xlu0 %v797, 32
        %v892 = vpop.permute.xlu0 %891
        %895 = vrot.lane.b32.xlu0 %v815, 48
        %v896 = vpop.permute.xlu0 %895
        %899 = vrot.lane.b32.xlu0 %v806, 64
        %v900 = vpop.permute.xlu0 %899
        %903 = vrot.lane.b32.xlu0 %v816, 80
        %v904 = vpop.permute.xlu0 %903
        %907 = vrot.lane.b32.xlu0 %v813, 96
        %v908 = vpop.permute.xlu0 %907
        %911 = vrot.lane.b32.xlu0 %v817, 112
        %v912 = vpop.permute.xlu0 %911
        %915 = vrot.lane.b32.xlu0 %v882, 16
        %v916 = vpop.permute.xlu0 %915
        %919 = vrot.lane.b32.xlu0 %v865, 32
        %v920 = vpop.permute.xlu0 %919
        %923 = vrot.lane.b32.xlu0 %v883, 48
        %v924 = vpop.permute.xlu0 %923
        %927 = vrot.lane.b32.xlu0 %v874, 64
        %v928 = vpop.permute.xlu0 %927
        %931 = vrot.lane.b32.xlu0 %v884, 80
        %v932 = vpop.permute.xlu0 %931
        %935 = vrot.lane.b32.xlu0 %v881, 96
        %v936 = vpop.permute.xlu0 %935
        %939 = vrot.lane.b32.xlu0 %v885, 112
        %v940 = vpop.permute.xlu0 %939
        %v942 = vsel %vm457, %v790, %v888
        %v943 = vsel %vm459, %v942, %v892
        %v944 = vsel %vm461, %v943, %v896
        %v945 = vsel %vm463, %v944, %v900
        %v946 = vsel %vm465, %v945, %v904
        %v947 = vsel %vm467, %v946, %v908
        %v948 = vsel %vm469, %v947, %v912
        %v949 = vsel %vm457, %v858, %v916
        %v950 = vsel %vm459, %v949, %v920
        %v951 = vsel %vm461, %v950, %v924
        %v952 = vsel %vm463, %v951, %v928
        %v953 = vsel %vm465, %v952, %v932
        %v954 = vsel %vm467, %v953, %v936
        %v955 = vsel %vm469, %v954, %v940
        %956 = vst [vmem:[#allocation3 + $0x10] sm:$0xf] %v948
        %957 = vst [vmem:[#allocation3 + $0x18] sm:$0xf] %v955
        %vm962 = vcmask 1046528
        %v963 = vrot.slane %v253, 1
        %v964 = vrot.slane %v254, 1
        %v965 = vsel %vm962, %v963, %v964
        %v966 = vrot.slane %v255, 1
        %v967 = vsel %vm962, %v964, %v966
        %v968 = vrot.slane %v256, 1
        %v969 = vrot.slane %v257, 1
        %v970 = vsel %vm962, %v968, %v969
        %v971 = vrot.slane %v258, 1
        %v972 = vsel %vm962, %v969, %v971
        %v973 = vrot.slane %v259, 1
        %v974 = vrot.slane %v260, 1
        %v975 = vsel %vm962, %v973, %v974
        %v976 = vrot.slane %v261, 1
        %v977 = vsel %vm962, %v974, %v976
        %v978 = vrot.slane %v262, 1
        %v979 = vrot.slane %v263, 1
        %v980 = vsel %vm962, %v978, %v979
        %v981 = vrot.slane %v264, 1
        %v982 = vsel %vm962, %v979, %v981
        %v991 = vcombine.low %v965, %v975
        %v992 = vcombine.high %v965, %v975
        %v994 = vunpack.c.l.s4 1983009808
        %v995 = vunpack.c.0.s8 %v994
        %v996 = vlaneseq
        %v997 = vshrl.u32 %v996, 7
        %v998 = vsub.s32 %v995, %v997
        %v999 = vrot.slane %v991, %v998
        %v1001 = vunpack.c.l.s4 1983009808
        %v1002 = vunpack.c.0.s8 %v1001
        %v1003 = vlaneseq
        %v1004 = vshrl.u32 %v1003, 7
        %v1005 = vsub.s32 %v1002, %v1004
        %v1006 = vrot.slane %v992, %v1005
        %v1007 = vcombine.low %v970, %v980
        %v1008 = vcombine.high %v970, %v980
        %v1010 = vunpack.c.l.s4 1983009808
        %v1011 = vunpack.c.0.s8 %v1010
        %v1012 = vlaneseq
        %v1013 = vshrl.u32 %v1012, 7
        %v1014 = vsub.s32 %v1011, %v1013
        %v1015 = vrot.slane %v1007, %v1014
        %v1017 = vunpack.c.l.s4 1983009808
        %v1018 = vunpack.c.0.s8 %v1017
        %v1019 = vlaneseq
        %v1020 = vshrl.u32 %v1019, 7
        %v1021 = vsub.s32 %v1018, %v1020
        %v1022 = vrot.slane %v1008, %v1021
        %v1023 = vcombine.low %v999, %v1015
        %v1024 = vcombine.high %v999, %v1015
        %v1026 = vunpack.c.l.s4 1934713408
        %v1027 = vunpack.c.0.s8 %v1026
        %v1028 = vlaneseq
        %v1029 = vshrl.u32 %v1028, 7
        %v1030 = vsub.s32 %v1027, %v1029
        %v1031 = vrot.slane %v1023, %v1030
        %v1033 = vunpack.c.l.s4 1934713408
        %v1034 = vunpack.c.0.s8 %v1033
        %v1035 = vlaneseq
        %v1036 = vshrl.u32 %v1035, 7
        %v1037 = vsub.s32 %v1034, %v1036
        %v1038 = vrot.slane %v1024, %v1037
        %v1039 = vcombine.low %v1006, %v1022
        %v1040 = vcombine.high %v1006, %v1022
        %v1042 = vunpack.c.l.s4 1934713408
        %v1043 = vunpack.c.0.s8 %v1042
        %v1044 = vlaneseq
        %v1045 = vshrl.u32 %v1044, 7
        %v1046 = vsub.s32 %v1043, %v1045
        %v1047 = vrot.slane %v1039, %v1046
        %v1049 = vunpack.c.l.s4 1934713408
        %v1050 = vunpack.c.0.s8 %v1049
        %v1051 = vlaneseq
        %v1052 = vshrl.u32 %v1051, 7
        %v1053 = vsub.s32 %v1050, %v1052
        %v1054 = vrot.slane %v1040, %v1053
        %v1055 = vcombine.high %v1031, 0.0
        %v1056 = vcombine.high %v1038, 0.0
        %v1057 = vcombine.high %v1047, 0.0
        %v1058 = vcombine.high %v1054, 0.0
        %v1059 = vcombine.low %v967, %v977
        %v1060 = vcombine.high %v967, %v977
        %v1062 = vunpack.c.l.s4 1983009808
        %v1063 = vunpack.c.0.s8 %v1062
        %v1064 = vlaneseq
        %v1065 = vshrl.u32 %v1064, 7
        %v1066 = vsub.s32 %v1063, %v1065
        %v1067 = vrot.slane %v1059, %v1066
        %v1069 = vunpack.c.l.s4 1983009808
        %v1070 = vunpack.c.0.s8 %v1069
        %v1071 = vlaneseq
        %v1072 = vshrl.u32 %v1071, 7
        %v1073 = vsub.s32 %v1070, %v1072
        %v1074 = vrot.slane %v1060, %v1073
        %v1075 = vcombine.low %v972, %v982
        %v1076 = vcombine.high %v972, %v982
        %v1078 = vunpack.c.l.s4 1983009808
        %v1079 = vunpack.c.0.s8 %v1078
        %v1080 = vlaneseq
        %v1081 = vshrl.u32 %v1080, 7
        %v1082 = vsub.s32 %v1079, %v1081
        %v1083 = vrot.slane %v1075, %v1082
        %v1085 = vunpack.c.l.s4 1983009808
        %v1086 = vunpack.c.0.s8 %v1085
        %v1087 = vlaneseq
        %v1088 = vshrl.u32 %v1087, 7
        %v1089 = vsub.s32 %v1086, %v1088
        %v1090 = vrot.slane %v1076, %v1089
        %v1091 = vcombine.low %v1067, %v1083
        %v1092 = vcombine.high %v1067, %v1083
        %v1094 = vunpack.c.l.s4 1934713408
        %v1095 = vunpack.c.0.s8 %v1094
        %v1096 = vlaneseq
        %v1097 = vshrl.u32 %v1096, 7
        %v1098 = vsub.s32 %v1095, %v1097
        %v1099 = vrot.slane %v1091, %v1098
        %v1101 = vunpack.c.l.s4 1934713408
        %v1102 = vunpack.c.0.s8 %v1101
        %v1103 = vlaneseq
        %v1104 = vshrl.u32 %v1103, 7
        %v1105 = vsub.s32 %v1102, %v1104
        %v1106 = vrot.slane %v1092, %v1105
        %v1107 = vcombine.low %v1074, %v1090
        %v1108 = vcombine.high %v1074, %v1090
        %v1110 = vunpack.c.l.s4 1934713408
        %v1111 = vunpack.c.0.s8 %v1110
        %v1112 = vlaneseq
        %v1113 = vshrl.u32 %v1112, 7
        %v1114 = vsub.s32 %v1111, %v1113
        %v1115 = vrot.slane %v1107, %v1114
        %v1117 = vunpack.c.l.s4 1934713408
        %v1118 = vunpack.c.0.s8 %v1117
        %v1119 = vlaneseq
        %v1120 = vshrl.u32 %v1119, 7
        %v1121 = vsub.s32 %v1118, %v1120
        %v1122 = vrot.slane %v1108, %v1121
        %v1123 = vcombine.high %v1099, 0.0
        %v1124 = vcombine.high %v1106, 0.0
        %v1125 = vcombine.high %v1115, 0.0
        %v1126 = vcombine.high %v1122, 0.0
        %1128 = vrot.lane.b32.xlu0 %v1055, 16
        %v1129 = vpop.permute.xlu0 %1128
        %1132 = vrot.lane.b32.xlu0 %v1038, 32
        %v1133 = vpop.permute.xlu0 %1132
        %1136 = vrot.lane.b32.xlu0 %v1056, 48
        %v1137 = vpop.permute.xlu0 %1136
        %1140 = vrot.lane.b32.xlu0 %v1047, 64
        %v1141 = vpop.permute.xlu0 %1140
        %1144 = vrot.lane.b32.xlu0 %v1057, 80
        %v1145 = vpop.permute.xlu0 %1144
        %1148 = vrot.lane.b32.xlu0 %v1054, 96
        %v1149 = vpop.permute.xlu0 %1148
        %1152 = vrot.lane.b32.xlu0 %v1058, 112
        %v1153 = vpop.permute.xlu0 %1152
        %1156 = vrot.lane.b32.xlu0 %v1123, 16
        %v1157 = vpop.permute.xlu0 %1156
        %1160 = vrot.lane.b32.xlu0 %v1106, 32
        %v1161 = vpop.permute.xlu0 %1160
        %1164 = vrot.lane.b32.xlu0 %v1124, 48
        %v1165 = vpop.permute.xlu0 %1164
        %1168 = vrot.lane.b32.xlu0 %v1115, 64
        %v1169 = vpop.permute.xlu0 %1168
        %1172 = vrot.lane.b32.xlu0 %v1125, 80
        %v1173 = vpop.permute.xlu0 %1172
        %1176 = vrot.lane.b32.xlu0 %v1122, 96
        %v1177 = vpop.permute.xlu0 %1176
        %1180 = vrot.lane.b32.xlu0 %v1126, 112
        %v1181 = vpop.permute.xlu0 %1180
        %v1183 = vsel %vm457, %v1031, %v1129
        %v1184 = vsel %vm459, %v1183, %v1133
        %v1185 = vsel %vm461, %v1184, %v1137
        %v1186 = vsel %vm463, %v1185, %v1141
        %v1187 = vsel %vm465, %v1186, %v1145
        %v1188 = vsel %vm467, %v1187, %v1149
        %v1189 = vsel %vm469, %v1188, %v1153
        %v1190 = vsel %vm457, %v1099, %v1157
        %v1191 = vsel %vm459, %v1190, %v1161
        %v1192 = vsel %vm461, %v1191, %v1165
        %v1193 = vsel %vm463, %v1192, %v1169
        %v1194 = vsel %vm465, %v1193, %v1173
        %v1195 = vsel %vm467, %v1194, %v1177
        %v1196 = vsel %vm469, %v1195, %v1181
        %v1199 = vrot.slane %v1189, 4
        %v1200 = vrot.slane %v1196, 4
        %1203 = vst [vmem:[#allocation3 + $0x10] sm:$0xf0] %v1199
        %1204 = vst [vmem:[#allocation3 + $0x18] sm:$0xf0] %v1200
        %1205 = vrot.lane.b32.xlu0 %v965, 127
        %v1206 = vpop.permute.xlu0 %1205
        %1207 = vrot.lane.b32.xlu0 %v967, 127
        %v1208 = vpop.permute.xlu0 %1207
        %1209 = vrot.lane.b32.xlu0 %v970, 127
        %v1210 = vpop.permute.xlu0 %1209
        %1211 = vrot.lane.b32.xlu0 %v972, 127
        %v1212 = vpop.permute.xlu0 %1211
        %1213 = vrot.lane.b32.xlu0 %v975, 127
        %v1214 = vpop.permute.xlu0 %1213
        %1215 = vrot.lane.b32.xlu0 %v977, 127
        %v1216 = vpop.permute.xlu0 %1215
        %1217 = vrot.lane.b32.xlu0 %v980, 127
        %v1218 = vpop.permute.xlu0 %1217
        %1219 = vrot.lane.b32.xlu0 %v982, 127
        %v1220 = vpop.permute.xlu0 %1219
        %v1229 = vcombine.low %v1206, %v1214
        %v1230 = vcombine.high %v1206, %v1214
        %v1232 = vunpack.c.l.s4 1983009808
        %v1233 = vunpack.c.0.s8 %v1232
        %v1234 = vlaneseq
        %v1235 = vshrl.u32 %v1234, 7
        %v1236 = vsub.s32 %v1233, %v1235
        %v1237 = vrot.slane %v1229, %v1236
        %v1239 = vunpack.c.l.s4 1983009808
        %v1240 = vunpack.c.0.s8 %v1239
        %v1241 = vlaneseq
        %v1242 = vshrl.u32 %v1241, 7
        %v1243 = vsub.s32 %v1240, %v1242
        %v1244 = vrot.slane %v1230, %v1243
        %v1245 = vcombine.low %v1210, %v1218
        %v1246 = vcombine.high %v1210, %v1218
        %v1248 = vunpack.c.l.s4 1983009808
        %v1249 = vunpack.c.0.s8 %v1248
        %v1250 = vlaneseq
        %v1251 = vshrl.u32 %v1250, 7
        %v1252 = vsub.s32 %v1249, %v1251
        %v1253 = vrot.slane %v1245, %v1252
        %v1255 = vunpack.c.l.s4 1983009808
        %v1256 = vunpack.c.0.s8 %v1255
        %v1257 = vlaneseq
        %v1258 = vshrl.u32 %v1257, 7
        %v1259 = vsub.s32 %v1256, %v1258
        %v1260 = vrot.slane %v1246, %v1259
        %v1261 = vcombine.low %v1237, %v1253
        %v1262 = vcombine.high %v1237, %v1253
        %v1264 = vunpack.c.l.s4 1934713408
        %v1265 = vunpack.c.0.s8 %v1264
        %v1266 = vlaneseq
        %v1267 = vshrl.u32 %v1266, 7
        %v1268 = vsub.s32 %v1265, %v1267
        %v1269 = vrot.slane %v1261, %v1268
        %v1271 = vunpack.c.l.s4 1934713408
        %v1272 = vunpack.c.0.s8 %v1271
        %v1273 = vlaneseq
        %v1274 = vshrl.u32 %v1273, 7
        %v1275 = vsub.s32 %v1272, %v1274
        %v1276 = vrot.slane %v1262, %v1275
        %v1277 = vcombine.low %v1244, %v1260
        %v1278 = vcombine.high %v1244, %v1260
        %v1280 = vunpack.c.l.s4 1934713408
        %v1281 = vunpack.c.0.s8 %v1280
        %v1282 = vlaneseq
        %v1283 = vshrl.u32 %v1282, 7
        %v1284 = vsub.s32 %v1281, %v1283
        %v1285 = vrot.slane %v1277, %v1284
        %v1287 = vunpack.c.l.s4 1934713408
        %v1288 = vunpack.c.0.s8 %v1287
        %v1289 = vlaneseq
        %v1290 = vshrl.u32 %v1289, 7
        %v1291 = vsub.s32 %v1288, %v1290
        %v1292 = vrot.slane %v1278, %v1291
        %v1293 = vcombine.high %v1269, 0.0
        %v1294 = vcombine.high %v1276, 0.0
        %v1295 = vcombine.high %v1285, 0.0
        %v1296 = vcombine.high %v1292, 0.0
        %v1297 = vcombine.low %v1208, %v1216
        %v1298 = vcombine.high %v1208, %v1216
        %v1300 = vunpack.c.l.s4 1983009808
        %v1301 = vunpack.c.0.s8 %v1300
        %v1302 = vlaneseq
        %v1303 = vshrl.u32 %v1302, 7
        %v1304 = vsub.s32 %v1301, %v1303
        %v1305 = vrot.slane %v1297, %v1304
        %v1307 = vunpack.c.l.s4 1983009808
        %v1308 = vunpack.c.0.s8 %v1307
        %v1309 = vlaneseq
        %v1310 = vshrl.u32 %v1309, 7
        %v1311 = vsub.s32 %v1308, %v1310
        %v1312 = vrot.slane %v1298, %v1311
        %v1313 = vcombine.low %v1212, %v1220
        %v1314 = vcombine.high %v1212, %v1220
        %v1316 = vunpack.c.l.s4 1983009808
        %v1317 = vunpack.c.0.s8 %v1316
        %v1318 = vlaneseq
        %v1319 = vshrl.u32 %v1318, 7
        %v1320 = vsub.s32 %v1317, %v1319
        %v1321 = vrot.slane %v1313, %v1320
        %v1323 = vunpack.c.l.s4 1983009808
        %v1324 = vunpack.c.0.s8 %v1323
        %v1325 = vlaneseq
        %v1326 = vshrl.u32 %v1325, 7
        %v1327 = vsub.s32 %v1324, %v1326
        %v1328 = vrot.slane %v1314, %v1327
        %v1329 = vcombine.low %v1305, %v1321
        %v1330 = vcombine.high %v1305, %v1321
        %v1332 = vunpack.c.l.s4 1934713408
        %v1333 = vunpack.c.0.s8 %v1332
        %v1334 = vlaneseq
        %v1335 = vshrl.u32 %v1334, 7
        %v1336 = vsub.s32 %v1333, %v1335
        %v1337 = vrot.slane %v1329, %v1336
        %v1339 = vunpack.c.l.s4 1934713408
        %v1340 = vunpack.c.0.s8 %v1339
        %v1341 = vlaneseq
        %v1342 = vshrl.u32 %v1341, 7
        %v1343 = vsub.s32 %v1340, %v1342
        %v1344 = vrot.slane %v1330, %v1343
        %v1345 = vcombine.low %v1312, %v1328
        %v1346 = vcombine.high %v1312, %v1328
        %v1348 = vunpack.c.l.s4 1934713408
        %v1349 = vunpack.c.0.s8 %v1348
        %v1350 = vlaneseq
        %v1351 = vshrl.u32 %v1350, 7
        %v1352 = vsub.s32 %v1349, %v1351
        %v1353 = vrot.slane %v1345, %v1352
        %v1355 = vunpack.c.l.s4 1934713408
        %v1356 = vunpack.c.0.s8 %v1355
        %v1357 = vlaneseq
        %v1358 = vshrl.u32 %v1357, 7
        %v1359 = vsub.s32 %v1356, %v1358
        %v1360 = vrot.slane %v1346, %v1359
        %v1361 = vcombine.high %v1337, 0.0
        %v1362 = vcombine.high %v1344, 0.0
        %v1363 = vcombine.high %v1353, 0.0
        %v1364 = vcombine.high %v1360, 0.0
        %1366 = vrot.lane.b32.xlu0 %v1293, 16
        %v1367 = vpop.permute.xlu0 %1366
        %1370 = vrot.lane.b32.xlu0 %v1276, 32
        %v1371 = vpop.permute.xlu0 %1370
        %1374 = vrot.lane.b32.xlu0 %v1294, 48
        %v1375 = vpop.permute.xlu0 %1374
        %1378 = vrot.lane.b32.xlu0 %v1285, 64
        %v1379 = vpop.permute.xlu0 %1378
        %1382 = vrot.lane.b32.xlu0 %v1295, 80
        %v1383 = vpop.permute.xlu0 %1382
        %1386 = vrot.lane.b32.xlu0 %v1292, 96
        %v1387 = vpop.permute.xlu0 %1386
        %1390 = vrot.lane.b32.xlu0 %v1296, 112
        %v1391 = vpop.permute.xlu0 %1390
        %1394 = vrot.lane.b32.xlu0 %v1361, 16
        %v1395 = vpop.permute.xlu0 %1394
        %1398 = vrot.lane.b32.xlu0 %v1344, 32
        %v1399 = vpop.permute.xlu0 %1398
        %1402 = vrot.lane.b32.xlu0 %v1362, 48
        %v1403 = vpop.permute.xlu0 %1402
        %1406 = vrot.lane.b32.xlu0 %v1353, 64
        %v1407 = vpop.permute.xlu0 %1406
        %1410 = vrot.lane.b32.xlu0 %v1363, 80
        %v1411 = vpop.permute.xlu0 %1410
        %1414 = vrot.lane.b32.xlu0 %v1360, 96
        %v1415 = vpop.permute.xlu0 %1414
        %1418 = vrot.lane.b32.xlu0 %v1364, 112
        %v1419 = vpop.permute.xlu0 %1418
        %v1421 = vsel %vm457, %v1269, %v1367
        %v1422 = vsel %vm459, %v1421, %v1371
        %v1423 = vsel %vm461, %v1422, %v1375
        %v1424 = vsel %vm463, %v1423, %v1379
        %v1425 = vsel %vm465, %v1424, %v1383
        %v1426 = vsel %vm467, %v1425, %v1387
        %v1427 = vsel %vm469, %v1426, %v1391
        %v1428 = vsel %vm457, %v1337, %v1395
        %v1429 = vsel %vm459, %v1428, %v1399
        %v1430 = vsel %vm461, %v1429, %v1403
        %v1431 = vsel %vm463, %v1430, %v1407
        %v1432 = vsel %vm465, %v1431, %v1411
        %v1433 = vsel %vm467, %v1432, %v1415
        %v1434 = vsel %vm469, %v1433, %v1419
        %1435 = vst [vmem:[#allocation3 + $0x20] sm:$0xf] %v1427
        %1436 = vst [vmem:[#allocation3 + $0x28] sm:$0xf] %v1434
        %1437 = vrot.lane.b32.xlu0 %v965, 126
        %v1438 = vpop.permute.xlu0 %1437
        %1439 = vrot.lane.b32.xlu0 %v967, 126
        %v1440 = vpop.permute.xlu0 %1439
        %1441 = vrot.lane.b32.xlu0 %v970, 126
        %v1442 = vpop.permute.xlu0 %1441
        %1443 = vrot.lane.b32.xlu0 %v972, 126
        %v1444 = vpop.permute.xlu0 %1443
        %1445 = vrot.lane.b32.xlu0 %v975, 126
        %v1446 = vpop.permute.xlu0 %1445
        %1447 = vrot.lane.b32.xlu0 %v977, 126
        %v1448 = vpop.permute.xlu0 %1447
        %1449 = vrot.lane.b32.xlu0 %v980, 126
        %v1450 = vpop.permute.xlu0 %1449
        %1451 = vrot.lane.b32.xlu0 %v982, 126
        %v1452 = vpop.permute.xlu0 %1451
        %v1461 = vcombine.low %v1438, %v1446
        %v1462 = vcombine.high %v1438, %v1446
        %v1464 = vunpack.c.l.s4 1983009808
        %v1465 = vunpack.c.0.s8 %v1464
        %v1466 = vlaneseq
        %v1467 = vshrl.u32 %v1466, 7
        %v1468 = vsub.s32 %v1465, %v1467
        %v1469 = vrot.slane %v1461, %v1468
        %v1471 = vunpack.c.l.s4 1983009808
        %v1472 = vunpack.c.0.s8 %v1471
        %v1473 = vlaneseq
        %v1474 = vshrl.u32 %v1473, 7
        %v1475 = vsub.s32 %v1472, %v1474
        %v1476 = vrot.slane %v1462, %v1475
        %v1477 = vcombine.low %v1442, %v1450
        %v1478 = vcombine.high %v1442, %v1450
        %v1480 = vunpack.c.l.s4 1983009808
        %v1481 = vunpack.c.0.s8 %v1480
        %v1482 = vlaneseq
        %v1483 = vshrl.u32 %v1482, 7
        %v1484 = vsub.s32 %v1481, %v1483
        %v1485 = vrot.slane %v1477, %v1484
        %v1487 = vunpack.c.l.s4 1983009808
        %v1488 = vunpack.c.0.s8 %v1487
        %v1489 = vlaneseq
        %v1490 = vshrl.u32 %v1489, 7
        %v1491 = vsub.s32 %v1488, %v1490
        %v1492 = vrot.slane %v1478, %v1491
        %v1493 = vcombine.low %v1469, %v1485
        %v1494 = vcombine.high %v1469, %v1485
        %v1496 = vunpack.c.l.s4 1934713408
        %v1497 = vunpack.c.0.s8 %v1496
        %v1498 = vlaneseq
        %v1499 = vshrl.u32 %v1498, 7
        %v1500 = vsub.s32 %v1497, %v1499
        %v1501 = vrot.slane %v1493, %v1500
        %v1503 = vunpack.c.l.s4 1934713408
        %v1504 = vunpack.c.0.s8 %v1503
        %v1505 = vlaneseq
        %v1506 = vshrl.u32 %v1505, 7
        %v1507 = vsub.s32 %v1504, %v1506
        %v1508 = vrot.slane %v1494, %v1507
        %v1509 = vcombine.low %v1476, %v1492
        %v1510 = vcombine.high %v1476, %v1492
        %v1512 = vunpack.c.l.s4 1934713408
        %v1513 = vunpack.c.0.s8 %v1512
        %v1514 = vlaneseq
        %v1515 = vshrl.u32 %v1514, 7
        %v1516 = vsub.s32 %v1513, %v1515
        %v1517 = vrot.slane %v1509, %v1516
        %v1519 = vunpack.c.l.s4 1934713408
        %v1520 = vunpack.c.0.s8 %v1519
        %v1521 = vlaneseq
        %v1522 = vshrl.u32 %v1521, 7
        %v1523 = vsub.s32 %v1520, %v1522
        %v1524 = vrot.slane %v1510, %v1523
        %v1525 = vcombine.high %v1501, 0.0
        %v1526 = vcombine.high %v1508, 0.0
        %v1527 = vcombine.high %v1517, 0.0
        %v1528 = vcombine.high %v1524, 0.0
        %v1529 = vcombine.low %v1440, %v1448
        %v1530 = vcombine.high %v1440, %v1448
        %v1532 = vunpack.c.l.s4 1983009808
        %v1533 = vunpack.c.0.s8 %v1532
        %v1534 = vlaneseq
        %v1535 = vshrl.u32 %v1534, 7
        %v1536 = vsub.s32 %v1533, %v1535
        %v1537 = vrot.slane %v1529, %v1536
        %v1539 = vunpack.c.l.s4 1983009808
        %v1540 = vunpack.c.0.s8 %v1539
        %v1541 = vlaneseq
        %v1542 = vshrl.u32 %v1541, 7
        %v1543 = vsub.s32 %v1540, %v1542
        %v1544 = vrot.slane %v1530, %v1543
        %v1545 = vcombine.low %v1444, %v1452
        %v1546 = vcombine.high %v1444, %v1452
        %v1548 = vunpack.c.l.s4 1983009808
        %v1549 = vunpack.c.0.s8 %v1548
        %v1550 = vlaneseq
        %v1551 = vshrl.u32 %v1550, 7
        %v1552 = vsub.s32 %v1549, %v1551
        %v1553 = vrot.slane %v1545, %v1552
        %v1555 = vunpack.c.l.s4 1983009808
        %v1556 = vunpack.c.0.s8 %v1555
        %v1557 = vlaneseq
        %v1558 = vshrl.u32 %v1557, 7
        %v1559 = vsub.s32 %v1556, %v1558
        %v1560 = vrot.slane %v1546, %v1559
        %v1561 = vcombine.low %v1537, %v1553
        %v1562 = vcombine.high %v1537, %v1553
        %v1564 = vunpack.c.l.s4 1934713408
        %v1565 = vunpack.c.0.s8 %v1564
        %v1566 = vlaneseq
        %v1567 = vshrl.u32 %v1566, 7
        %v1568 = vsub.s32 %v1565, %v1567
        %v1569 = vrot.slane %v1561, %v1568
        %v1571 = vunpack.c.l.s4 1934713408
        %v1572 = vunpack.c.0.s8 %v1571
        %v1573 = vlaneseq
        %v1574 = vshrl.u32 %v1573, 7
        %v1575 = vsub.s32 %v1572, %v1574
        %v1576 = vrot.slane %v1562, %v1575
        %v1577 = vcombine.low %v1544, %v1560
        %v1578 = vcombine.high %v1544, %v1560
        %v1580 = vunpack.c.l.s4 1934713408
        %v1581 = vunpack.c.0.s8 %v1580
        %v1582 = vlaneseq
        %v1583 = vshrl.u32 %v1582, 7
        %v1584 = vsub.s32 %v1581, %v1583
        %v1585 = vrot.slane %v1577, %v1584
        %v1587 = vunpack.c.l.s4 1934713408
        %v1588 = vunpack.c.0.s8 %v1587
        %v1589 = vlaneseq
        %v1590 = vshrl.u32 %v1589, 7
        %v1591 = vsub.s32 %v1588, %v1590
        %v1592 = vrot.slane %v1578, %v1591
        %v1593 = vcombine.high %v1569, 0.0
        %v1594 = vcombine.high %v1576, 0.0
        %v1595 = vcombine.high %v1585, 0.0
        %v1596 = vcombine.high %v1592, 0.0
        %1598 = vrot.lane.b32.xlu0 %v1525, 16
        %v1599 = vpop.permute.xlu0 %1598
        %1602 = vrot.lane.b32.xlu0 %v1508, 32
        %v1603 = vpop.permute.xlu0 %1602
        %1606 = vrot.lane.b32.xlu0 %v1526, 48
        %v1607 = vpop.permute.xlu0 %1606
        %1610 = vrot.lane.b32.xlu0 %v1517, 64
        %v1611 = vpop.permute.xlu0 %1610
        %1614 = vrot.lane.b32.xlu0 %v1527, 80
        %v1615 = vpop.permute.xlu0 %1614
        %1618 = vrot.lane.b32.xlu0 %v1524, 96
        %v1619 = vpop.permute.xlu0 %1618
        %1622 = vrot.lane.b32.xlu0 %v1528, 112
        %v1623 = vpop.permute.xlu0 %1622
        %1626 = vrot.lane.b32.xlu0 %v1593, 16
        %v1627 = vpop.permute.xlu0 %1626
        %1630 = vrot.lane.b32.xlu0 %v1576, 32
        %v1631 = vpop.permute.xlu0 %1630
        %1634 = vrot.lane.b32.xlu0 %v1594, 48
        %v1635 = vpop.permute.xlu0 %1634
        %1638 = vrot.lane.b32.xlu0 %v1585, 64
        %v1639 = vpop.permute.xlu0 %1638
        %1642 = vrot.lane.b32.xlu0 %v1595, 80
        %v1643 = vpop.permute.xlu0 %1642
        %1646 = vrot.lane.b32.xlu0 %v1592, 96
        %v1647 = vpop.permute.xlu0 %1646
        %1650 = vrot.lane.b32.xlu0 %v1596, 112
        %v1651 = vpop.permute.xlu0 %1650
        %v1653 = vsel %vm457, %v1501, %v1599
        %v1654 = vsel %vm459, %v1653, %v1603
        %v1655 = vsel %vm461, %v1654, %v1607
        %v1656 = vsel %vm463, %v1655, %v1611
        %v1657 = vsel %vm465, %v1656, %v1615
        %v1658 = vsel %vm467, %v1657, %v1619
        %v1659 = vsel %vm469, %v1658, %v1623
        %v1660 = vsel %vm457, %v1569, %v1627
        %v1661 = vsel %vm459, %v1660, %v1631
        %v1662 = vsel %vm461, %v1661, %v1635
        %v1663 = vsel %vm463, %v1662, %v1639
        %v1664 = vsel %vm465, %v1663, %v1643
        %v1665 = vsel %vm467, %v1664, %v1647
        %v1666 = vsel %vm469, %v1665, %v1651
        %v1669 = vrot.slane %v1659, 4
        %v1670 = vrot.slane %v1666, 4
        %1673 = vst [vmem:[#allocation3 + $0x20] sm:$0xf0] %v1669
        %1674 = vst [vmem:[#allocation3 + $0x28] sm:$0xf0] %v1670
        %vm1675 = vcmask 1045504
        %v1676 = vrot.slane %v253, 2
        %v1677 = vrot.slane %v254, 2
        %v1678 = vsel %vm1675, %v1676, %v1677
        %v1679 = vrot.slane %v255, 2
        %v1680 = vsel %vm1675, %v1677, %v1679
        %v1681 = vrot.slane %v256, 2
        %v1682 = vrot.slane %v257, 2
        %v1683 = vsel %vm1675, %v1681, %v1682
        %v1684 = vrot.slane %v258, 2
        %v1685 = vsel %vm1675, %v1682, %v1684
        %v1686 = vrot.slane %v259, 2
        %v1687 = vrot.slane %v260, 2
        %v1688 = vsel %vm1675, %v1686, %v1687
        %v1689 = vrot.slane %v261, 2
        %v1690 = vsel %vm1675, %v1687, %v1689
        %v1691 = vrot.slane %v262, 2
        %v1692 = vrot.slane %v263, 2
        %v1693 = vsel %vm1675, %v1691, %v1692
        %v1694 = vrot.slane %v264, 2
        %v1695 = vsel %vm1675, %v1692, %v1694
        %v1704 = vcombine.low %v1678, %v1688
        %v1705 = vcombine.high %v1678, %v1688
        %v1707 = vunpack.c.l.s4 1983009808
        %v1708 = vunpack.c.0.s8 %v1707
        %v1709 = vlaneseq
        %v1710 = vshrl.u32 %v1709, 7
        %v1711 = vsub.s32 %v1708, %v1710
        %v1712 = vrot.slane %v1704, %v1711
        %v1714 = vunpack.c.l.s4 1983009808
        %v1715 = vunpack.c.0.s8 %v1714
        %v1716 = vlaneseq
        %v1717 = vshrl.u32 %v1716, 7
        %v1718 = vsub.s32 %v1715, %v1717
        %v1719 = vrot.slane %v1705, %v1718
        %v1720 = vcombine.low %v1683, %v1693
        %v1721 = vcombine.high %v1683, %v1693
        %v1723 = vunpack.c.l.s4 1983009808
        %v1724 = vunpack.c.0.s8 %v1723
        %v1725 = vlaneseq
        %v1726 = vshrl.u32 %v1725, 7
        %v1727 = vsub.s32 %v1724, %v1726
        %v1728 = vrot.slane %v1720, %v1727
        %v1730 = vunpack.c.l.s4 1983009808
        %v1731 = vunpack.c.0.s8 %v1730
        %v1732 = vlaneseq
        %v1733 = vshrl.u32 %v1732, 7
        %v1734 = vsub.s32 %v1731, %v1733
        %v1735 = vrot.slane %v1721, %v1734
        %v1736 = vcombine.low %v1712, %v1728
        %v1737 = vcombine.high %v1712, %v1728
        %v1739 = vunpack.c.l.s4 1934713408
        %v1740 = vunpack.c.0.s8 %v1739
        %v1741 = vlaneseq
        %v1742 = vshrl.u32 %v1741, 7
        %v1743 = vsub.s32 %v1740, %v1742
        %v1744 = vrot.slane %v1736, %v1743
        %v1746 = vunpack.c.l.s4 1934713408
        %v1747 = vunpack.c.0.s8 %v1746
        %v1748 = vlaneseq
        %v1749 = vshrl.u32 %v1748, 7
        %v1750 = vsub.s32 %v1747, %v1749
        %v1751 = vrot.slane %v1737, %v1750
        %v1752 = vcombine.low %v1719, %v1735
        %v1753 = vcombine.high %v1719, %v1735
        %v1755 = vunpack.c.l.s4 1934713408
        %v1756 = vunpack.c.0.s8 %v1755
        %v1757 = vlaneseq
        %v1758 = vshrl.u32 %v1757, 7
        %v1759 = vsub.s32 %v1756, %v1758
        %v1760 = vrot.slane %v1752, %v1759
        %v1762 = vunpack.c.l.s4 1934713408
        %v1763 = vunpack.c.0.s8 %v1762
        %v1764 = vlaneseq
        %v1765 = vshrl.u32 %v1764, 7
        %v1766 = vsub.s32 %v1763, %v1765
        %v1767 = vrot.slane %v1753, %v1766
        %v1768 = vcombine.high %v1744, 0.0
        %v1769 = vcombine.high %v1751, 0.0
        %v1770 = vcombine.high %v1760, 0.0
        %v1771 = vcombine.high %v1767, 0.0
        %v1772 = vcombine.low %v1680, %v1690
        %v1773 = vcombine.high %v1680, %v1690
        %v1775 = vunpack.c.l.s4 1983009808
        %v1776 = vunpack.c.0.s8 %v1775
        %v1777 = vlaneseq
        %v1778 = vshrl.u32 %v1777, 7
        %v1779 = vsub.s32 %v1776, %v1778
        %v1780 = vrot.slane %v1772, %v1779
        %v1782 = vunpack.c.l.s4 1983009808
        %v1783 = vunpack.c.0.s8 %v1782
        %v1784 = vlaneseq
        %v1785 = vshrl.u32 %v1784, 7
        %v1786 = vsub.s32 %v1783, %v1785
        %v1787 = vrot.slane %v1773, %v1786
        %v1788 = vcombine.low %v1685, %v1695
        %v1789 = vcombine.high %v1685, %v1695
        %v1791 = vunpack.c.l.s4 1983009808
        %v1792 = vunpack.c.0.s8 %v1791
        %v1793 = vlaneseq
        %v1794 = vshrl.u32 %v1793, 7
        %v1795 = vsub.s32 %v1792, %v1794
        %v1796 = vrot.slane %v1788, %v1795
        %v1798 = vunpack.c.l.s4 1983009808
        %v1799 = vunpack.c.0.s8 %v1798
        %v1800 = vlaneseq
        %v1801 = vshrl.u32 %v1800, 7
        %v1802 = vsub.s32 %v1799, %v1801
        %v1803 = vrot.slane %v1789, %v1802
        %v1804 = vcombine.low %v1780, %v1796
        %v1805 = vcombine.high %v1780, %v1796
        %v1807 = vunpack.c.l.s4 1934713408
        %v1808 = vunpack.c.0.s8 %v1807
        %v1809 = vlaneseq
        %v1810 = vshrl.u32 %v1809, 7
        %v1811 = vsub.s32 %v1808, %v1810
        %v1812 = vrot.slane %v1804, %v1811
        %v1814 = vunpack.c.l.s4 1934713408
        %v1815 = vunpack.c.0.s8 %v1814
        %v1816 = vlaneseq
        %v1817 = vshrl.u32 %v1816, 7
        %v1818 = vsub.s32 %v1815, %v1817
        %v1819 = vrot.slane %v1805, %v1818
        %v1820 = vcombine.low %v1787, %v1803
        %v1821 = vcombine.high %v1787, %v1803
        %v1823 = vunpack.c.l.s4 1934713408
        %v1824 = vunpack.c.0.s8 %v1823
        %v1825 = vlaneseq
        %v1826 = vshrl.u32 %v1825, 7
        %v1827 = vsub.s32 %v1824, %v1826
        %v1828 = vrot.slane %v1820, %v1827
        %v1830 = vunpack.c.l.s4 1934713408
        %v1831 = vunpack.c.0.s8 %v1830
        %v1832 = vlaneseq
        %v1833 = vshrl.u32 %v1832, 7
        %v1834 = vsub.s32 %v1831, %v1833
        %v1835 = vrot.slane %v1821, %v1834
        %v1836 = vcombine.high %v1812, 0.0
        %v1837 = vcombine.high %v1819, 0.0
        %v1838 = vcombine.high %v1828, 0.0
        %v1839 = vcombine.high %v1835, 0.0
        %1841 = vrot.lane.b32.xlu0 %v1768, 16
        %v1842 = vpop.permute.xlu0 %1841
        %1845 = vrot.lane.b32.xlu0 %v1751, 32
        %v1846 = vpop.permute.xlu0 %1845
        %1849 = vrot.lane.b32.xlu0 %v1769, 48
        %v1850 = vpop.permute.xlu0 %1849
        %1853 = vrot.lane.b32.xlu0 %v1760, 64
        %v1854 = vpop.permute.xlu0 %1853
        %1857 = vrot.lane.b32.xlu0 %v1770, 80
        %v1858 = vpop.permute.xlu0 %1857
        %1861 = vrot.lane.b32.xlu0 %v1767, 96
        %v1862 = vpop.permute.xlu0 %1861
        %1865 = vrot.lane.b32.xlu0 %v1771, 112
        %v1866 = vpop.permute.xlu0 %1865
        %1869 = vrot.lane.b32.xlu0 %v1836, 16
        %v1870 = vpop.permute.xlu0 %1869
        %1873 = vrot.lane.b32.xlu0 %v1819, 32
        %v1874 = vpop.permute.xlu0 %1873
        %1877 = vrot.lane.b32.xlu0 %v1837, 48
        %v1878 = vpop.permute.xlu0 %1877
        %1881 = vrot.lane.b32.xlu0 %v1828, 64
        %v1882 = vpop.permute.xlu0 %1881
        %1885 = vrot.lane.b32.xlu0 %v1838, 80
        %v1886 = vpop.permute.xlu0 %1885
        %1889 = vrot.lane.b32.xlu0 %v1835, 96
        %v1890 = vpop.permute.xlu0 %1889
        %1893 = vrot.lane.b32.xlu0 %v1839, 112
        %v1894 = vpop.permute.xlu0 %1893
        %v1896 = vsel %vm457, %v1744, %v1842
        %v1897 = vsel %vm459, %v1896, %v1846
        %v1898 = vsel %vm461, %v1897, %v1850
        %v1899 = vsel %vm463, %v1898, %v1854
        %v1900 = vsel %vm465, %v1899, %v1858
        %v1901 = vsel %vm467, %v1900, %v1862
        %v1902 = vsel %vm469, %v1901, %v1866
        %v1903 = vsel %vm457, %v1812, %v1870
        %v1904 = vsel %vm459, %v1903, %v1874
        %v1905 = vsel %vm461, %v1904, %v1878
        %v1906 = vsel %vm463, %v1905, %v1882
        %v1907 = vsel %vm465, %v1906, %v1886
        %v1908 = vsel %vm467, %v1907, %v1890
        %v1909 = vsel %vm469, %v1908, %v1894
        %1910 = vst [vmem:[#allocation3 + $0x30] sm:$0xf] %v1902
        %1911 = vst [vmem:[#allocation3 + $0x38] sm:$0xf] %v1909
        %1912 = vrot.lane.b32.xlu0 %v1678, 127
        %v1913 = vpop.permute.xlu0 %1912
        %1914 = vrot.lane.b32.xlu0 %v1680, 127
        %v1915 = vpop.permute.xlu0 %1914
        %1916 = vrot.lane.b32.xlu0 %v1683, 127
        %v1917 = vpop.permute.xlu0 %1916
        %1918 = vrot.lane.b32.xlu0 %v1685, 127
        %v1919 = vpop.permute.xlu0 %1918
        %1920 = vrot.lane.b32.xlu0 %v1688, 127
        %v1921 = vpop.permute.xlu0 %1920
        %1922 = vrot.lane.b32.xlu0 %v1690, 127
        %v1923 = vpop.permute.xlu0 %1922
        %1924 = vrot.lane.b32.xlu0 %v1693, 127
        %v1925 = vpop.permute.xlu0 %1924
        %1926 = vrot.lane.b32.xlu0 %v1695, 127
        %v1927 = vpop.permute.xlu0 %1926
        %v1936 = vcombine.low %v1913, %v1921
        %v1937 = vcombine.high %v1913, %v1921
        %v1939 = vunpack.c.l.s4 1983009808
        %v1940 = vunpack.c.0.s8 %v1939
        %v1941 = vlaneseq
        %v1942 = vshrl.u32 %v1941, 7
        %v1943 = vsub.s32 %v1940, %v1942
        %v1944 = vrot.slane %v1936, %v1943
        %v1946 = vunpack.c.l.s4 1983009808
        %v1947 = vunpack.c.0.s8 %v1946
        %v1948 = vlaneseq
        %v1949 = vshrl.u32 %v1948, 7
        %v1950 = vsub.s32 %v1947, %v1949
        %v1951 = vrot.slane %v1937, %v1950
        %v1952 = vcombine.low %v1917, %v1925
        %v1953 = vcombine.high %v1917, %v1925
        %v1955 = vunpack.c.l.s4 1983009808
        %v1956 = vunpack.c.0.s8 %v1955
        %v1957 = vlaneseq
        %v1958 = vshrl.u32 %v1957, 7
        %v1959 = vsub.s32 %v1956, %v1958
        %v1960 = vrot.slane %v1952, %v1959
        %v1962 = vunpack.c.l.s4 1983009808
        %v1963 = vunpack.c.0.s8 %v1962
        %v1964 = vlaneseq
        %v1965 = vshrl.u32 %v1964, 7
        %v1966 = vsub.s32 %v1963, %v1965
        %v1967 = vrot.slane %v1953, %v1966
        %v1968 = vcombine.low %v1944, %v1960
        %v1969 = vcombine.high %v1944, %v1960
        %v1971 = vunpack.c.l.s4 1934713408
        %v1972 = vunpack.c.0.s8 %v1971
        %v1973 = vlaneseq
        %v1974 = vshrl.u32 %v1973, 7
        %v1975 = vsub.s32 %v1972, %v1974
        %v1976 = vrot.slane %v1968, %v1975
        %v1978 = vunpack.c.l.s4 1934713408
        %v1979 = vunpack.c.0.s8 %v1978
        %v1980 = vlaneseq
        %v1981 = vshrl.u32 %v1980, 7
        %v1982 = vsub.s32 %v1979, %v1981
        %v1983 = vrot.slane %v1969, %v1982
        %v1984 = vcombine.low %v1951, %v1967
        %v1985 = vcombine.high %v1951, %v1967
        %v1987 = vunpack.c.l.s4 1934713408
        %v1988 = vunpack.c.0.s8 %v1987
        %v1989 = vlaneseq
        %v1990 = vshrl.u32 %v1989, 7
        %v1991 = vsub.s32 %v1988, %v1990
        %v1992 = vrot.slane %v1984, %v1991
        %v1994 = vunpack.c.l.s4 1934713408
        %v1995 = vunpack.c.0.s8 %v1994
        %v1996 = vlaneseq
        %v1997 = vshrl.u32 %v1996, 7
        %v1998 = vsub.s32 %v1995, %v1997
        %v1999 = vrot.slane %v1985, %v1998
        %v2000 = vcombine.high %v1976, 0.0
        %v2001 = vcombine.high %v1983, 0.0
        %v2002 = vcombine.high %v1992, 0.0
        %v2003 = vcombine.high %v1999, 0.0
        %v2004 = vcombine.low %v1915, %v1923
        %v2005 = vcombine.high %v1915, %v1923
        %v2007 = vunpack.c.l.s4 1983009808
        %v2008 = vunpack.c.0.s8 %v2007
        %v2009 = vlaneseq
        %v2010 = vshrl.u32 %v2009, 7
        %v2011 = vsub.s32 %v2008, %v2010
        %v2012 = vrot.slane %v2004, %v2011
        %v2014 = vunpack.c.l.s4 1983009808
        %v2015 = vunpack.c.0.s8 %v2014
        %v2016 = vlaneseq
        %v2017 = vshrl.u32 %v2016, 7
        %v2018 = vsub.s32 %v2015, %v2017
        %v2019 = vrot.slane %v2005, %v2018
        %v2020 = vcombine.low %v1919, %v1927
        %v2021 = vcombine.high %v1919, %v1927
        %v2023 = vunpack.c.l.s4 1983009808
        %v2024 = vunpack.c.0.s8 %v2023
        %v2025 = vlaneseq
        %v2026 = vshrl.u32 %v2025, 7
        %v2027 = vsub.s32 %v2024, %v2026
        %v2028 = vrot.slane %v2020, %v2027
        %v2030 = vunpack.c.l.s4 1983009808
        %v2031 = vunpack.c.0.s8 %v2030
        %v2032 = vlaneseq
        %v2033 = vshrl.u32 %v2032, 7
        %v2034 = vsub.s32 %v2031, %v2033
        %v2035 = vrot.slane %v2021, %v2034
        %v2036 = vcombine.low %v2012, %v2028
        %v2037 = vcombine.high %v2012, %v2028
        %v2039 = vunpack.c.l.s4 1934713408
        %v2040 = vunpack.c.0.s8 %v2039
        %v2041 = vlaneseq
        %v2042 = vshrl.u32 %v2041, 7
        %v2043 = vsub.s32 %v2040, %v2042
        %v2044 = vrot.slane %v2036, %v2043
        %v2046 = vunpack.c.l.s4 1934713408
        %v2047 = vunpack.c.0.s8 %v2046
        %v2048 = vlaneseq
        %v2049 = vshrl.u32 %v2048, 7
        %v2050 = vsub.s32 %v2047, %v2049
        %v2051 = vrot.slane %v2037, %v2050
        %v2052 = vcombine.low %v2019, %v2035
        %v2053 = vcombine.high %v2019, %v2035
        %v2055 = vunpack.c.l.s4 1934713408
        %v2056 = vunpack.c.0.s8 %v2055
        %v2057 = vlaneseq
        %v2058 = vshrl.u32 %v2057, 7
        %v2059 = vsub.s32 %v2056, %v2058
        %v2060 = vrot.slane %v2052, %v2059
        %v2062 = vunpack.c.l.s4 1934713408
        %v2063 = vunpack.c.0.s8 %v2062
        %v2064 = vlaneseq
        %v2065 = vshrl.u32 %v2064, 7
        %v2066 = vsub.s32 %v2063, %v2065
        %v2067 = vrot.slane %v2053, %v2066
        %v2068 = vcombine.high %v2044, 0.0
        %v2069 = vcombine.high %v2051, 0.0
        %v2070 = vcombine.high %v2060, 0.0
        %v2071 = vcombine.high %v2067, 0.0
        %2073 = vrot.lane.b32.xlu0 %v2000, 16
        %v2074 = vpop.permute.xlu0 %2073
        %2077 = vrot.lane.b32.xlu0 %v1983, 32
        %v2078 = vpop.permute.xlu0 %2077
        %2081 = vrot.lane.b32.xlu0 %v2001, 48
        %v2082 = vpop.permute.xlu0 %2081
        %2085 = vrot.lane.b32.xlu0 %v1992, 64
        %v2086 = vpop.permute.xlu0 %2085
        %2089 = vrot.lane.b32.xlu0 %v2002, 80
        %v2090 = vpop.permute.xlu0 %2089
        %2093 = vrot.lane.b32.xlu0 %v1999, 96
        %v2094 = vpop.permute.xlu0 %2093
        %2097 = vrot.lane.b32.xlu0 %v2003, 112
        %v2098 = vpop.permute.xlu0 %2097
        %2101 = vrot.lane.b32.xlu0 %v2068, 16
        %v2102 = vpop.permute.xlu0 %2101
        %2105 = vrot.lane.b32.xlu0 %v2051, 32
        %v2106 = vpop.permute.xlu0 %2105
        %2109 = vrot.lane.b32.xlu0 %v2069, 48
        %v2110 = vpop.permute.xlu0 %2109
        %2113 = vrot.lane.b32.xlu0 %v2060, 64
        %v2114 = vpop.permute.xlu0 %2113
        %2117 = vrot.lane.b32.xlu0 %v2070, 80
        %v2118 = vpop.permute.xlu0 %2117
        %2121 = vrot.lane.b32.xlu0 %v2067, 96
        %v2122 = vpop.permute.xlu0 %2121
        %2125 = vrot.lane.b32.xlu0 %v2071, 112
        %v2126 = vpop.permute.xlu0 %2125
        %v2128 = vsel %vm457, %v1976, %v2074
        %v2129 = vsel %vm459, %v2128, %v2078
        %v2130 = vsel %vm461, %v2129, %v2082
        %v2131 = vsel %vm463, %v2130, %v2086
        %v2132 = vsel %vm465, %v2131, %v2090
        %v2133 = vsel %vm467, %v2132, %v2094
        %v2134 = vsel %vm469, %v2133, %v2098
        %v2135 = vsel %vm457, %v2044, %v2102
        %v2136 = vsel %vm459, %v2135, %v2106
        %v2137 = vsel %vm461, %v2136, %v2110
        %v2138 = vsel %vm463, %v2137, %v2114
        %v2139 = vsel %vm465, %v2138, %v2118
        %v2140 = vsel %vm467, %v2139, %v2122
        %v2141 = vsel %vm469, %v2140, %v2126
        %v2144 = vrot.slane %v2134, 4
        %v2145 = vrot.slane %v2141, 4
        %2148 = vst [vmem:[#allocation3 + $0x30] sm:$0xf0] %v2144
        %2149 = vst [vmem:[#allocation3 + $0x38] sm:$0xf0] %v2145
        %2150 = vrot.lane.b32.xlu0 %v1678, 126
        %v2151 = vpop.permute.xlu0 %2150
        %2152 = vrot.lane.b32.xlu0 %v1680, 126
        %v2153 = vpop.permute.xlu0 %2152
        %2154 = vrot.lane.b32.xlu0 %v1683, 126
        %v2155 = vpop.permute.xlu0 %2154
        %2156 = vrot.lane.b32.xlu0 %v1685, 126
        %v2157 = vpop.permute.xlu0 %2156
        %2158 = vrot.lane.b32.xlu0 %v1688, 126
        %v2159 = vpop.permute.xlu0 %2158
        %2160 = vrot.lane.b32.xlu0 %v1690, 126
        %v2161 = vpop.permute.xlu0 %2160
        %2162 = vrot.lane.b32.xlu0 %v1693, 126
        %v2163 = vpop.permute.xlu0 %2162
        %2164 = vrot.lane.b32.xlu0 %v1695, 126
        %v2165 = vpop.permute.xlu0 %2164
        %v2174 = vcombine.low %v2151, %v2159
        %v2175 = vcombine.high %v2151, %v2159
        %v2177 = vunpack.c.l.s4 1983009808
        %v2178 = vunpack.c.0.s8 %v2177
        %v2179 = vlaneseq
        %v2180 = vshrl.u32 %v2179, 7
        %v2181 = vsub.s32 %v2178, %v2180
        %v2182 = vrot.slane %v2174, %v2181
        %v2184 = vunpack.c.l.s4 1983009808
        %v2185 = vunpack.c.0.s8 %v2184
        %v2186 = vlaneseq
        %v2187 = vshrl.u32 %v2186, 7
        %v2188 = vsub.s32 %v2185, %v2187
        %v2189 = vrot.slane %v2175, %v2188
        %v2190 = vcombine.low %v2155, %v2163
        %v2191 = vcombine.high %v2155, %v2163
        %v2193 = vunpack.c.l.s4 1983009808
        %v2194 = vunpack.c.0.s8 %v2193
        %v2195 = vlaneseq
        %v2196 = vshrl.u32 %v2195, 7
        %v2197 = vsub.s32 %v2194, %v2196
        %v2198 = vrot.slane %v2190, %v2197
        %v2200 = vunpack.c.l.s4 1983009808
        %v2201 = vunpack.c.0.s8 %v2200
        %v2202 = vlaneseq
        %v2203 = vshrl.u32 %v2202, 7
        %v2204 = vsub.s32 %v2201, %v2203
        %v2205 = vrot.slane %v2191, %v2204
        %v2206 = vcombine.low %v2182, %v2198
        %v2207 = vcombine.high %v2182, %v2198
        %v2209 = vunpack.c.l.s4 1934713408
        %v2210 = vunpack.c.0.s8 %v2209
        %v2211 = vlaneseq
        %v2212 = vshrl.u32 %v2211, 7
        %v2213 = vsub.s32 %v2210, %v2212
        %v2214 = vrot.slane %v2206, %v2213
        %v2216 = vunpack.c.l.s4 1934713408
        %v2217 = vunpack.c.0.s8 %v2216
        %v2218 = vlaneseq
        %v2219 = vshrl.u32 %v2218, 7
        %v2220 = vsub.s32 %v2217, %v2219
        %v2221 = vrot.slane %v2207, %v2220
        %v2222 = vcombine.low %v2189, %v2205
        %v2223 = vcombine.high %v2189, %v2205
        %v2225 = vunpack.c.l.s4 1934713408
        %v2226 = vunpack.c.0.s8 %v2225
        %v2227 = vlaneseq
        %v2228 = vshrl.u32 %v2227, 7
        %v2229 = vsub.s32 %v2226, %v2228
        %v2230 = vrot.slane %v2222, %v2229
        %v2232 = vunpack.c.l.s4 1934713408
        %v2233 = vunpack.c.0.s8 %v2232
        %v2234 = vlaneseq
        %v2235 = vshrl.u32 %v2234, 7
        %v2236 = vsub.s32 %v2233, %v2235
        %v2237 = vrot.slane %v2223, %v2236
        %v2238 = vcombine.high %v2214, 0.0
        %v2239 = vcombine.high %v2221, 0.0
        %v2240 = vcombine.high %v2230, 0.0
        %v2241 = vcombine.high %v2237, 0.0
        %v2242 = vcombine.low %v2153, %v2161
        %v2243 = vcombine.high %v2153, %v2161
        %v2245 = vunpack.c.l.s4 1983009808
        %v2246 = vunpack.c.0.s8 %v2245
        %v2247 = vlaneseq
        %v2248 = vshrl.u32 %v2247, 7
        %v2249 = vsub.s32 %v2246, %v2248
        %v2250 = vrot.slane %v2242, %v2249
        %v2252 = vunpack.c.l.s4 1983009808
        %v2253 = vunpack.c.0.s8 %v2252
        %v2254 = vlaneseq
        %v2255 = vshrl.u32 %v2254, 7
        %v2256 = vsub.s32 %v2253, %v2255
        %v2257 = vrot.slane %v2243, %v2256
        %v2258 = vcombine.low %v2157, %v2165
        %v2259 = vcombine.high %v2157, %v2165
        %v2261 = vunpack.c.l.s4 1983009808
        %v2262 = vunpack.c.0.s8 %v2261
        %v2263 = vlaneseq
        %v2264 = vshrl.u32 %v2263, 7
        %v2265 = vsub.s32 %v2262, %v2264
        %v2266 = vrot.slane %v2258, %v2265
        %v2268 = vunpack.c.l.s4 1983009808
        %v2269 = vunpack.c.0.s8 %v2268
        %v2270 = vlaneseq
        %v2271 = vshrl.u32 %v2270, 7
        %v2272 = vsub.s32 %v2269, %v2271
        %v2273 = vrot.slane %v2259, %v2272
        %v2274 = vcombine.low %v2250, %v2266
        %v2275 = vcombine.high %v2250, %v2266
        %v2277 = vunpack.c.l.s4 1934713408
        %v2278 = vunpack.c.0.s8 %v2277
        %v2279 = vlaneseq
        %v2280 = vshrl.u32 %v2279, 7
        %v2281 = vsub.s32 %v2278, %v2280
        %v2282 = vrot.slane %v2274, %v2281
        %v2284 = vunpack.c.l.s4 1934713408
        %v2285 = vunpack.c.0.s8 %v2284
        %v2286 = vlaneseq
        %v2287 = vshrl.u32 %v2286, 7
        %v2288 = vsub.s32 %v2285, %v2287
        %v2289 = vrot.slane %v2275, %v2288
        %v2290 = vcombine.low %v2257, %v2273
        %v2291 = vcombine.high %v2257, %v2273
        %v2293 = vunpack.c.l.s4 1934713408
        %v2294 = vunpack.c.0.s8 %v2293
        %v2295 = vlaneseq
        %v2296 = vshrl.u32 %v2295, 7
        %v2297 = vsub.s32 %v2294, %v2296
        %v2298 = vrot.slane %v2290, %v2297
        %v2300 = vunpack.c.l.s4 1934713408
        %v2301 = vunpack.c.0.s8 %v2300
        %v2302 = vlaneseq
        %v2303 = vshrl.u32 %v2302, 7
        %v2304 = vsub.s32 %v2301, %v2303
        %v2305 = vrot.slane %v2291, %v2304
        %v2306 = vcombine.high %v2282, 0.0
        %v2307 = vcombine.high %v2289, 0.0
        %v2308 = vcombine.high %v2298, 0.0
        %v2309 = vcombine.high %v2305, 0.0
        %2311 = vrot.lane.b32.xlu0 %v2238, 16
        %v2312 = vpop.permute.xlu0 %2311
        %2315 = vrot.lane.b32.xlu0 %v2221, 32
        %v2316 = vpop.permute.xlu0 %2315
        %2319 = vrot.lane.b32.xlu0 %v2239, 48
        %v2320 = vpop.permute.xlu0 %2319
        %2323 = vrot.lane.b32.xlu0 %v2230, 64
        %v2324 = vpop.permute.xlu0 %2323
        %2327 = vrot.lane.b32.xlu0 %v2240, 80
        %v2328 = vpop.permute.xlu0 %2327
        %2331 = vrot.lane.b32.xlu0 %v2237, 96
        %v2332 = vpop.permute.xlu0 %2331
        %2335 = vrot.lane.b32.xlu0 %v2241, 112
        %v2336 = vpop.permute.xlu0 %2335
        %2339 = vrot.lane.b32.xlu0 %v2306, 16
        %v2340 = vpop.permute.xlu0 %2339
        %2343 = vrot.lane.b32.xlu0 %v2289, 32
        %v2344 = vpop.permute.xlu0 %2343
        %2347 = vrot.lane.b32.xlu0 %v2307, 48
        %v2348 = vpop.permute.xlu0 %2347
        %2351 = vrot.lane.b32.xlu0 %v2298, 64
        %v2352 = vpop.permute.xlu0 %2351
        %2355 = vrot.lane.b32.xlu0 %v2308, 80
        %v2356 = vpop.permute.xlu0 %2355
        %2359 = vrot.lane.b32.xlu0 %v2305, 96
        %v2360 = vpop.permute.xlu0 %2359
        %2363 = vrot.lane.b32.xlu0 %v2309, 112
        %v2364 = vpop.permute.xlu0 %2363
        %v2366 = vsel %vm457, %v2214, %v2312
        %v2367 = vsel %vm459, %v2366, %v2316
        %v2368 = vsel %vm461, %v2367, %v2320
        %v2369 = vsel %vm463, %v2368, %v2324
        %v2370 = vsel %vm465, %v2369, %v2328
        %v2371 = vsel %vm467, %v2370, %v2332
        %v2372 = vsel %vm469, %v2371, %v2336
        %v2373 = vsel %vm457, %v2282, %v2340
        %v2374 = vsel %vm459, %v2373, %v2344
        %v2375 = vsel %vm461, %v2374, %v2348
        %v2376 = vsel %vm463, %v2375, %v2352
        %v2377 = vsel %vm465, %v2376, %v2356
        %v2378 = vsel %vm467, %v2377, %v2360
        %v2379 = vsel %vm469, %v2378, %v2364
        %2380 = vst [vmem:[#allocation3 + $0x40] sm:$0xf] %v2372
        %2381 = vst [vmem:[#allocation3 + $0x48] sm:$0xf] %v2379
        %v2382 = vld [vmem:[%s1] sm:$0x3]
        %v2383 = vld [vmem:[#allocation3] sm:$0xff]
        %v2384 = vld [vmem:[#allocation3 + $0x8] sm:$0xff]
        %v2385 = vld [vmem:[#allocation3 + $0x10] sm:$0xff]
        %v2386 = vld [vmem:[#allocation3 + $0x18] sm:$0xff]
        %v2387 = vld [vmem:[#allocation3 + $0x20] sm:$0xff]
        %v2388 = vld [vmem:[#allocation3 + $0x28] sm:$0xff]
        %v2389 = vld [vmem:[#allocation3 + $0x30] sm:$0xff]
        %v2390 = vld [vmem:[#allocation3 + $0x38] sm:$0xff]
        %v2391 = vld [vmem:[#allocation3 + $0x40] sm:$0xf]
        %v2392 = vld [vmem:[#allocation3 + $0x48] sm:$0xf]
        %v2393 = vpack.c.bf16 %v2385, %v2383
        %v2394 = vpack.c.bf16 %v2386, %v2384
        %v2395 = vpack.c.bf16 %v2389, %v2387
        %v2396 = vpack.c.bf16 %v2390, %v2388
        %v2397 = vpack.c.bf16 %v2391, %v2391
        %v2398 = vpack.c.bf16 %v2392, %v2392
        %v2399 = vld [vmem:[%s2] sm:$0xf]
        %2401 = vset.pattern.permute.xlu0 0
        %2402 = vperm.xlu0 %2401, %v2399
        %v2403 = vpop.permute.xlu0 %2402
        %vm2405 = vcmask 293888
        %v2407 = vsel %vm2405, %v2382, 0
        %vm2409 = vcmask 1041408
        %v2411 = vsel %vm2409, %v2397, 0
        %v2414 = vsel %vm2409, %v2398, 0
        %2416 = vmatprep.subr.bf16.mxu0 0
        %2417 = vmatpush1.bf16.msra.mxu0 0
        %2418 = vmatprep.subr.bf16.mxu0 0
        %2419 = vmatpush1.bf16.msra.mxu0 0
        %2420 = vmatprep.subr.bf16.mxu0 0
        %2421 = vmatpush1.bf16.msra.mxu0 0
        %2422 = vmatprep.subr.bf16.mxu0 0
        %2423 = vmatpush1.bf16.msra.mxu0 0
        %2424 = vmatprep.subr.bf16.mxu0 0
        %2425 = vmatpush1.bf16.msra.mxu0 0
        %2426 = vmatprep.subr.bf16.mxu0 %v2414
        %2427 = vmatpush1.bf16.msra.mxu0 %v2411
        %2428 = vmatprep.subr.bf16.mxu0 %v2396
        %2429 = vmatpush1.bf16.msra.mxu0 %v2395
        %2430 = vmatprep.subr.bf16.mxu0 %v2394
        %2431 = vmatpush1.bf16.msra.mxu0 %v2393
        %2432 = vmatprep.subr.bf16.mxu0 0
        %2433 = vmatpush2.bf16.msra.mxu0 0
        %2434 = vmatprep.subr.bf16.mxu0 0
        %2435 = vmatpush2.bf16.msra.mxu0 0
        %2436 = vmatprep.subr.bf16.mxu0 0
        %2437 = vmatpush2.bf16.msra.mxu0 0
        %2438 = vmatprep.subr.bf16.mxu0 0
        %2439 = vmatpush2.bf16.msra.mxu0 0
        %2440 = vmatprep.subr.bf16.mxu0 0
        %2441 = vmatpush2.bf16.msra.mxu0 0
        %2442 = vmatprep.subr.bf16.mxu0 0
        %2443 = vmatpush2.bf16.msra.mxu0 0
        %2444 = vmatprep.subr.bf16.mxu0 0
        %2445 = vmatpush2.bf16.msra.mxu0 0
        %2446 = vmatprep.subr.bf16.mxu0 0
        %2447 = vmatpush2.bf16.msra.mxu0 0
        %2448 = vmatprep.mubr.bf16.mxu0 0
        %2449 = vmatmul.mubr.bf16.gmra.mxu0 %v2407
        %v2450 = vpop.f32.mrf.mxu0
        %v2451 = vadd.f32 %v2403, %v2450
        %v2452 = vpop.f32.mrf.mxu0
        %v2453 = vadd.f32 %v2403, %v2452
        %v2454 = vpop.f32.mrf.mxu0
        %v2455 = vpop.f32.mrf.mxu0
        %2456 = vdwg.mxu0
        %v2457 = vadd.f32 %v2451, %v1427
        %v2458 = vadd.f32 %v2453, %v1434
        %v2461 = vcombine.low %v2457, %v2458
        %2463 = vst [vmem:[%s188] sm:$0xff] %v2461
        %s2464 = sand.u32 %s96, 1
        %s2465 = scalar_lea.sflag [#allocation6], %s2464
        %s2466 = sand.u32 %s96, 1
        %s2467 = smul.addr %s2466, 8
        %s2468 = scalar_lea.vmem [#allocation7], %s2467
        // Predicated region
        $region37: #{tpu_custom_call.1} parent=31 // pred_check
          %p2469 = pneg %p106
        $region38: #{tpu_custom_call.1} parent=31 // pred_check_branch
          %2471 = sbr.rel (%p2469) target = $region40
        $region39: #{tpu_custom_call.1} parent=31 // pred_region
          %s2473 = ssub.s32 128, 128
          %2474 = vsyncadd %s2465, %s2473
          %s2475 = smul.addr %s20, 2
          %s2476 = smul.addr %s2475, 64
          %s2477 = scalar_lea.hbm %s3, %s2476
          %s2479 = sshll.u32 %s2468, 4
          %s2480 = int_to_ptr.vmem [resolvable:$true] %s2479
          %2482 = dma.vmem_to_hbm [thread:$0]  %s2480, 128, %s2477, %s2465
        $region40: #{tpu_custom_call.1} parent=31 // pred_fallthru
          _
      $region32: #{tpu_custom_call.1} parent=5 // pred_fallthru
        _
      %p2483 = scmp.le.s32.totalorder 2, %s15
      // Predicated region
      $region41: #{tpu_custom_call.1} parent=5 // pred_check
        %p2484 = pneg %p2483
      $region42: #{tpu_custom_call.1} parent=5 // pred_check_branch
        %2486 = sbr.rel (%p2484) target = $region44
      $region43: #{tpu_custom_call.1} parent=5 // pred_region
        %s2487 = ssub.s32 %s15, 2
        // Predicated region
        $region45: #{tpu_custom_call.1} parent=43 // pred_check
          %p2488 = pneg %p112
        $region46: #{tpu_custom_call.1} parent=43 // pred_check_branch
          %2490 = sbr.rel (%p2488) target = $region48
        $region47: #{tpu_custom_call.1} parent=43 // pred_region
          %s2491 = sand.u32 %s97, 1
          %s2492 = scalar_lea.sflag [#allocation6], %s2491
          %s2493 = sand.u32 %s97, 1
          %s2494 = smul.addr %s2493, 8
          %s2495 = scalar_lea.vmem [#allocation7], %s2494
          %2496 = dma.done %s2492, 128
        $region48: #{tpu_custom_call.1} parent=43 // pred_fallthru
          _
      $region44: #{tpu_custom_call.1} parent=5 // pred_fallthru
        _
    $region6: #{tpu_custom_call.1} parent=1 // loop_footer
      %s19 = sadd.s32 1, %s15
    $region7: #{tpu_custom_call.1} parent=1 // loop_footer_branch
      %14 = sbr.rel target = $region3
    $region8: #{tpu_custom_call.1} parent=1 // loop_exit
      _
    %2497 = vsyncpa [#allocation5], 1
    %s2498 = scalar_lea.sflag [#allocation5], 1
    %2499 = vsyncpa %s2498, 1
    %2500 = vsyncpa [#allocation6], 1
    %s2501 = scalar_lea.sflag [#allocation6], 1
    %2502 = vsyncpa %s2501, 1

</llo_original>
